<compile_context>
chip_gen: v6e
topology: v6e:2x2x1
jax: 0.10.0
libtpu: 0.0.40
codegen_flags: <defaults>
</compile_context>

<pallas_src>
import numpy as np
import jax
import jax.numpy as jnp
from jax import lax
from jax.experimental import pallas as pl
from jax.experimental.pallas import tpu as pltpu


def _encoder_head_kernel(x_ref, w_ref, shift_ref, p_ref, o_ref):
    # x_ref:     [Bt, HW, Cin]  bf16  channels-last backbone features
    # w_ref:     [Cin, D]       bf16  1x1-conv weight with BN scale folded in
    # shift_ref: [1, D]         f32   folded BN shift (beta - mean*scale)
    # p_ref:     [SS, HW]       bf16  adaptive-avg-pool operator
    # o_ref:     [Bt, SS, D]    f32
    bt, hw, cin = x_ref.shape
    ss = p_ref.shape[0]
    d = w_ref.shape[1]

    # 1x1 conv (+ folded BN scale): one MXU pass, M = Bt*HW, K = Cin, N = D.
    # The reshape only merges tile-aligned leading dims (HW is a multiple of 8,
    # Cin a multiple of 128) so it is free.
    x2 = x_ref[...].reshape(bt * hw, cin)
    y = jnp.dot(x2, w_ref[...], preferred_element_type=jnp.float32)   # [Bt*HW, D]

    # BN shift + ReLU on the VPU in f32 (shift broadcasts along sublanes).
    y = jnp.maximum(y + shift_ref[...], 0.0)

    # AdaptiveAvgPool2d as a batched matmul with the precomputed operator.
    # Tiny next to the conv matmul (K = HW); bf16 inputs, f32 accumulation.
    y3 = y.astype(jnp.bfloat16).reshape(bt, hw, d)
    p_b = jnp.broadcast_to(p_ref[...], (bt, ss, hw))
    pooled = lax.dot_general(
        p_b, y3,
        dimension_numbers=(((2,), (1,)), ((0,), (0,))),
        preferred_element_type=jnp.float32)                           # [Bt, SS, D]
    o_ref[...] = pooled.astype(o_ref.dtype)


def _adaptive_pool_matrix(out_size: int, in_size: int) -> np.ndarray:
    """1-D row-stochastic operator matching nn.AdaptiveAvgPool semantics."""
    P = np.zeros((out_size, in_size), dtype=np.float32)
    for i in range(out_size):
        start = (i * in_size) // out_size
        end = -((-(i + 1) * in_size) // out_size)  # ceil((i+1)*in/out)
        P[i, start:end] = 1.0 / (end - start)
    return P


def _vmem_capacity_bytes() -> int:
    try:
        return int(pltpu.get_tpu_info().vmem_capacity_bytes)
    except Exception:
        return 64 << 20    # conservative default (v7x per-TensorCore VMEM)


def _tensorcores_per_chip() -> int:
    """2 on v7x (grid 'parallel' axes are sharded across both TensorCores),
    1 on v5e/v6e (grid is a serial loop on a single TC)."""
    try:
        kind = (jax.devices()[0].device_kind or "").lower()
    except Exception:
        return 1
    return 2 if ("v7" in kind or "7x" in kind) else 1


def _pick_batch_tile(batch, hw, cin, d, ss, vmem_bytes, num_cores):
    """Largest batch tile that (a) divides the batch, (b) fits a conservative
    VMEM budget (double-buffered x and out blocks + the f32 intermediate +
    resident constants), and (c) leaves >= num_cores grid steps so v7x's two
    TensorCores both get work.  On single-TC chips one big step is preferred:
    extra steps only add ~0.35us pipeline overhead per step and shrink DMAs."""
    per_image = (2 * hw * cin * 2      # x block, bf16, double-buffered
                 + hw * d * 4          # f32 conv/BN/ReLU intermediate
                 + 2 * ss * d * 4)     # out block, f32, double-buffered
    const_bytes = 2 * (cin * d * 2 + d * 4 + ss * hw * 2)
    budget = int(vmem_bytes * 0.6) - const_bytes
    cap = max(1, budget // per_image)
    min_steps = min(num_cores, batch)
    best = 1
    for bt in range(1, min(batch, cap) + 1):
        if batch % bt == 0 and batch // bt >= min_steps:
            best = bt
    return best


def image_encoder_forward(features, conv_w, bn_gamma, bn_beta, bn_mean, bn_var,
                          encode_size, eps=1e-5, batch_tile=None,
                          features_layout="NCHW"):
    """features: backbone output, [B, 2048, Hf, Wf] (NCHW, PyTorch layout) or
    [B, Hf, Wf, 2048] (NHWC, TPU-native).  conv_w: [D, 2048, 1, 1].
    Returns [B, encode_size**2, D]  (== ImageEncoder.forward output)."""
    if features_layout == "NCHW":
        B, Cin, H, W = features.shape
        # One layout conversion (fuses with the bf16 cast in XLA); a TPU
        # backbone emitting NHWC makes this transpose disappear.
        x = jnp.transpose(features, (0, 2, 3, 1))
    else:  # "NHWC"
        B, H, W, Cin = features.shape
        x = features
    D = conv_w.shape[0]
    HW = H * W
    SS = encode_size * encode_size

    # --- wrapper glue: bf16 cast (the DMA'd bytes are half-size), BN folding.
    x = x.reshape(B, HW, Cin).astype(jnp.bfloat16)                    # [B, HW, Cin]
    inv_std = 1.0 / jnp.sqrt(bn_var + eps)
    scale = bn_gamma * inv_std                                        # [D]
    # Fold BN scale into the 1x1 conv weight; store as [Cin, D] (D on lanes).
    w_folded = (conv_w.reshape(D, Cin) * scale[:, None]).T.astype(jnp.bfloat16)
    shift = (bn_beta - bn_mean * scale).reshape(1, D).astype(jnp.float32)
    # pooled[i,j] = sum_{h,w} Ph[i,h] Pw[j,w] A[h,w]  -> row-major flatten = kron(Ph,Pw).
    # bf16 is exact when encode_size divides H,W; otherwise ~0.4%/weight, well
    # inside the verification tolerance (f32 accumulation is kept).
    pool = jnp.asarray(np.kron(_adaptive_pool_matrix(encode_size, H),
                               _adaptive_pool_matrix(encode_size, W)),
                       dtype=jnp.bfloat16)                            # [SS, HW]

    vmem_cap = _vmem_capacity_bytes()
    n_cores = _tensorcores_per_chip()
    Bt = (_pick_batch_tile(B, HW, Cin, D, SS, vmem_cap, n_cores)
          if batch_tile is None else batch_tile)
    assert B % Bt == 0

    flops = 2 * B * HW * Cin * D + 2 * B * SS * HW * D
    bytes_accessed = (B * HW * Cin * 2 + Cin * D * 2 + D * 4
                      + SS * HW * 2 + B * SS * D * 4)

    # NOTE: w / shift / pool have constant index maps, so Pallas keeps those
    # blocks resident across grid steps (no per-step re-DMA).  Their ~1 MiB of
    # default double-buffering is irrelevant next to the x block, so no
    # pipeline_mode override is needed.
    return pl.pallas_call(
        _encoder_head_kernel,
        out_shape=jax.ShapeDtypeStruct((B, SS, D), jnp.float32),
        grid=(B // Bt,),
        in_specs=[
            pl.BlockSpec((Bt, HW, Cin), lambda g: (g, 0, 0)),
            pl.BlockSpec((Cin, D), lambda g: (0, 0)),
            pl.BlockSpec((1, D), lambda g: (0, 0)),
            pl.BlockSpec((SS, HW), lambda g: (0, 0)),
        ],
        out_specs=pl.BlockSpec((Bt, SS, D), lambda g: (g, 0, 0)),
        compiler_params=pltpu.CompilerParams(
            dimension_semantics=("parallel",),
            # Explicit limit: don't let the 16/32 MiB default scoped limit cap
            # the block size; keep headroom under the physical capacity.
            vmem_limit_bytes=int(min(vmem_cap, 128 << 20) * 3 // 4)),
        cost_estimate=pl.CostEstimate(flops=flops, transcendentals=0,
                                      bytes_accessed=bytes_accessed),
    )(x, w_folded, shift, pool)


def _reference(features_nchw, conv_w, bn_gamma, bn_beta, bn_mean, bn_var,
               encode_size, eps=1e-5):
    """Pure-JAX f32 reference of the same head (for correctness check)."""
    B, Cin, H, W = features_nchw.shape
    D = conv_w.shape[0]
    w = conv_w.reshape(D, Cin)
    y = jnp.einsum('bchw,dc->bdhw', features_nchw, w,
                   precision=lax.Precision.HIGHEST)
    inv_std = 1.0 / jnp.sqrt(bn_var + eps)
    y = (y - bn_mean[None, :, None, None]) * (bn_gamma * inv_std)[None, :, None, None] \
        + bn_beta[None, :, None, None]
    y = jnp.maximum(y, 0.0)
    Ph = jnp.asarray(_adaptive_pool_matrix(encode_size, H))
    Pw = jnp.asarray(_adaptive_pool_matrix(encode_size, W))
    y = jnp.einsum('ih,bdhw->bdiw', Ph, y)
    y = jnp.einsum('jw,bdiw->bdij', Pw, y)
    return y.reshape(B, D, encode_size * encode_size).transpose(0, 2, 1)


if __name__ == "__main__":
    # Small but module-consistent shapes: in_channels=2048 is fixed by the
    # module; embed_dim / encode_size are constructor args chosen small.
    B, Cin, Hf, Wf = 2, 2048, 8, 8
    embed_dim, encode_size = 128, 4

    key = jax.random.PRNGKey(0)
    k_feat, k_w, k_g, k_b, k_m, k_v = jax.random.split(key, 6)

    # Stand-in for ResNet-101 output (post-ReLU features are non-negative).
    features = jnp.maximum(
        jax.random.normal(k_feat, (B, Cin, Hf, Wf), jnp.float32), 0.0)

    # Deterministic synthetic parameters (shapes from the module __init__).
    conv_w = 0.02 * jax.random.normal(k_w, (embed_dim, Cin, 1, 1), jnp.float32)
    bn_gamma = 1.0 + 0.1 * jax.random.normal(k_g, (embed_dim,), jnp.float32)
    bn_beta = 0.1 * jax.random.normal(k_b, (embed_dim,), jnp.float32)
    bn_mean = 0.1 * jax.random.normal(k_m, (embed_dim,), jnp.float32)
    bn_var = 1.0 + 0.1 * jax.random.uniform(k_v, (embed_dim,), jnp.float32)

    out = image_encoder_forward(features, conv_w, bn_gamma, bn_beta,
                                bn_mean, bn_var, encode_size)
    out = jax.block_until_ready(out)

    assert out.shape == (B, encode_size * encode_size, embed_dim), out.shape

    ref = jax.block_until_ready(
        _reference(features, conv_w, bn_gamma, bn_beta, bn_mean, bn_var,
                   encode_size))
    # bf16 inputs over a K=2048 contraction with f32 accumulation.
    np.testing.assert_allclose(np.asarray(out), np.asarray(ref),
                               rtol=2e-2, atol=1e-2)

    print("KERNEL_OK")
</pallas_src>

<mosaic_0001>
module attributes {stable_mosaic.version = 11 : i64} {
  func.func @_encoder_head_kernel(%arg0: i32, %arg1: memref<2x64x2048xbf16, #tpu.memory_space<vmem>>, %arg2: memref<2048x128xbf16, #tpu.memory_space<vmem>>, %arg3: memref<1x128xf32, #tpu.memory_space<vmem>>, %arg4: memref<16x64xbf16, #tpu.memory_space<vmem>>, %arg5: memref<2x16x128xf32, #tpu.memory_space<vmem>>) attributes {dimension_semantics = [#tpu.dimension_semantics<parallel>], iteration_bounds = array<i64: 1>, scalar_prefetch = 0 : i64, scratch_operands = 0 : i64, tpu.core_type = #tpu.core_type<tc>, window_params = [{transform_indices = @transform_0, window_bounds = array<i64: 2, 64, 2048>}, {pipeline_mode = #tpu.pipeline_mode<synchronous>, transform_indices = @transform_1, window_bounds = array<i64: 2048, 128>}, {pipeline_mode = #tpu.pipeline_mode<synchronous>, transform_indices = @transform_2, window_bounds = array<i64: 1, 128>}, {pipeline_mode = #tpu.pipeline_mode<synchronous>, transform_indices = @transform_3, window_bounds = array<i64: 16, 64>}, {transform_indices = @transform_4, window_bounds = array<i64: 2, 16, 128>}]} {
    %c0 = arith.constant 0 : index
    %c0_0 = arith.constant 0 : index
    %c0_1 = arith.constant 0 : index
    %0 = vector.load %arg1[%c0, %c0_0, %c0_1] : memref<2x64x2048xbf16, #tpu.memory_space<vmem>>, vector<2x64x2048xbf16>
    %1 = vector.shape_cast %0 : vector<2x64x2048xbf16> to vector<128x2048xbf16>
    %c0_2 = arith.constant 0 : index
    %c0_3 = arith.constant 0 : index
    %2 = vector.load %arg2[%c0_2, %c0_3] : memref<2048x128xbf16, #tpu.memory_space<vmem>>, vector<2048x128xbf16>
    %cst = arith.constant dense<0.000000e+00> : vector<128x128xf32>
    %3 = tpu.matmul %1, %2, %cst {dimension_numbers = #tpu.dot_dimension_numbers<[1], [0], [0], [1], [0, 0, 1, 1], [], []>} : vector<128x2048xbf16>, vector<2048x128xbf16>, vector<128x128xf32> -> vector<128x128xf32>
    %c0_4 = arith.constant 0 : index
    %c0_5 = arith.constant 0 : index
    %4 = vector.load %arg3[%c0_4, %c0_5] : memref<1x128xf32, #tpu.memory_space<vmem>>, vector<1x128xf32>
    %5 = vector.broadcast %4 : vector<1x128xf32> to vector<128x128xf32>
    %6 = arith.addf %3, %5 : vector<128x128xf32>
    %cst_6 = arith.constant 0.000000e+00 : f32
    %7 = vector.broadcast %cst_6 : f32 to vector<128x128xf32>
    %8 = arith.maximumf %6, %7 : vector<128x128xf32>
    %9 = arith.truncf %8 : vector<128x128xf32> to vector<128x128xbf16>
    %10 = vector.shape_cast %9 : vector<128x128xbf16> to vector<2x64x128xbf16>
    %c0_7 = arith.constant 0 : index
    %c0_8 = arith.constant 0 : index
    %11 = vector.load %arg4[%c0_7, %c0_8] : memref<16x64xbf16, #tpu.memory_space<vmem>>, vector<16x64xbf16>
    %12 = vector.shape_cast %11 : vector<16x64xbf16> to vector<1x16x64xbf16>
    %13 = vector.broadcast %12 : vector<1x16x64xbf16> to vector<2x16x64xbf16>
    %cst_9 = arith.constant dense<0.000000e+00> : vector<2x16x128xf32>
    %14 = tpu.matmul %13, %10, %cst_9 {dimension_numbers = #tpu.dot_dimension_numbers<[2], [1], [1], [2], [0, 0, 0, 1, 1, 2], [0], [0]>} : vector<2x16x64xbf16>, vector<2x64x128xbf16>, vector<2x16x128xf32> -> vector<2x16x128xf32>
    %c0_10 = arith.constant 0 : index
    %c0_11 = arith.constant 0 : index
    %c0_12 = arith.constant 0 : index
    %15 = vector.load %arg5[%c0_10, %c0_11, %c0_12] : memref<2x16x128xf32, #tpu.memory_space<vmem>>, vector<2x16x128xf32>
    tpu.vector_store %arg5[%c0_10, %c0_11, %c0_12], %14 {strides = array<i32>} : memref<2x16x128xf32, #tpu.memory_space<vmem>>, vector<2x16x128xf32>,
    return
  }
  func.func @transform_0(%arg0: i32) -> (i32, i32, i32) {
    %c0_i32 = arith.constant 0 : i32
    %c0_i32_0 = arith.constant 0 : i32
    %c0_i32_1 = arith.constant 0 : i32
    return %arg0, %c0_i32, %c0_i32_0 : i32, i32, i32
  }
  func.func @transform_1(%arg0: i32) -> (i32, i32) {
    %c0_i32 = arith.constant 0 : i32
    %c0_i32_0 = arith.constant 0 : i32
    %c0_i32_1 = arith.constant 0 : i32
    return %c0_i32, %c0_i32_0 : i32, i32
  }
  func.func @transform_2(%arg0: i32) -> (i32, i32) {
    %c0_i32 = arith.constant 0 : i32
    %c0_i32_0 = arith.constant 0 : i32
    %c0_i32_1 = arith.constant 0 : i32
    return %c0_i32, %c0_i32_0 : i32, i32
  }
  func.func @transform_3(%arg0: i32) -> (i32, i32) {
    %c0_i32 = arith.constant 0 : i32
    %c0_i32_0 = arith.constant 0 : i32
    %c0_i32_1 = arith.constant 0 : i32
    return %c0_i32, %c0_i32_0 : i32, i32
  }
  func.func @transform_4(%arg0: i32) -> (i32, i32, i32) {
    %c0_i32 = arith.constant 0 : i32
    %c0_i32_0 = arith.constant 0 : i32
    %c0_i32_1 = arith.constant 0 : i32
    return %arg0, %c0_i32, %c0_i32_0 : i32, i32, i32
  }
}

</mosaic_0001>

<llo_original>
// kernel: tpu_custom_call.1
$region0: #{tpu_custom_call.1}
  #allocation0 [shape = 'u32[]', space=smem, size = 0x4, offset = 0x4, fixed_abs, tag = 'smem constant byte address 0x4 - core index']
  #allocation1 [shape = 'u32[144,128]{1,0:T(1,128)}', space=vmem, size = 0x12000, scoped, tag = 'internal scratch']
  %s0 = inlined_call_operand.hbm [shape: bf16[2,64,2048], index: 0, kind: input, shape index: {}]
  %s1 = inlined_call_operand.hbm [shape: bf16[2048,128], index: 1, kind: input, shape index: {}]
  %s2 = inlined_call_operand.vmem [shape: f32[1,128], index: 2, kind: input, shape index: {}]
  %s3 = inlined_call_operand.hbm [shape: bf16[16,64], index: 3, kind: input, shape index: {}]
  %s4 = inlined_call_operand.hbm [shape: f32[2,16,128], index: 4, kind: output, shape index: {}]
  %s5 = sld [smem:[#allocation0]]
  $region38: #{tpu_custom_call.1} parent=0
    _
  %s7 = ssub.s32 1, %s5
  %s8 = scalar_select 0, %s7, %s5
  $region1: #{tpu_custom_call.1} parent=0
    #allocation2 [shape = 'u8[524288]{0}', space=vmem, size = 0x80000, scoped, tag = 'input window, operand 0, single buffered']
    #allocation3 [shape = 's32[1]{0}', space=sflag, size = 0x4, scoped, tag = 'scoped memory for tpu_custom_call.1']
    #allocation4 [shape = 's32[1]{0}', space=sflag, size = 0x4, scoped, tag = 'scoped memory for tpu_custom_call.1']
    #allocation5 [shape = 'u8[524288]{0}', space=vmem, size = 0x80000, scoped, tag = 'input window, operand 1, single buffered']
    #allocation6 [shape = 's32[1]{0}', space=sflag, size = 0x4, scoped, tag = 'scoped memory for tpu_custom_call.1']
    #allocation7 [shape = 'u8[4096]{0}', space=vmem, size = 0x1000, scoped, tag = 'input window, operand 3, single buffered']
    #allocation8 [shape = 'u8[16384]{0}', space=vmem, size = 0x4000, scoped, tag = 'output window, operand 0, single buffered']
    %9 = vsyncpa [#allocation3], 0
    %10 = vsyncpa [#allocation6], 0
    %11 = vsyncpa [#allocation4], 0
    // Predicated region
    $region2: #{tpu_custom_call.1} parent=1 // pred_check
      _
    $region3: #{tpu_custom_call.1} parent=1 // pred_check_branch
      %13 = sbr.rel (0) target = $region5
    $region4: #{tpu_custom_call.1} parent=1 // pred_region
      %s15 = ssub.s32 16384, 16384
      %16 = vsyncadd [#allocation3], %s15
      %s17 = sshll.u32 [#allocation2], 4
      %s18 = int_to_ptr.vmem [resolvable:$true] %s17
      %23 = dma.hbm_to_vmem [thread:$0]  %s0, 16384, %s18, [#allocation3], 1024, 1024, 64
    $region5: #{tpu_custom_call.1} parent=1 // pred_fallthru
      _
    // Predicated region
    $region6: #{tpu_custom_call.1} parent=1 // pred_check
      _
    $region7: #{tpu_custom_call.1} parent=1 // pred_check_branch
      %25 = sbr.rel (0) target = $region9
    $region8: #{tpu_custom_call.1} parent=1 // pred_region
      %s27 = ssub.s32 16384, 16384
      %28 = vsyncadd [#allocation6], %s27
      %s29 = sshll.u32 [#allocation5], 4
      %s30 = int_to_ptr.vmem [resolvable:$true] %s29
      %35 = dma.hbm_to_vmem [thread:$0]  %s1, 16384, %s30, [#allocation6], 64, 64, 4
    $region9: #{tpu_custom_call.1} parent=1 // pred_fallthru
      _
    // Predicated region
    $region10: #{tpu_custom_call.1} parent=1 // pred_check
      _
    $region11: #{tpu_custom_call.1} parent=1 // pred_check_branch
      %37 = sbr.rel (0) target = $region13
    $region12: #{tpu_custom_call.1} parent=1 // pred_region
      _
    $region13: #{tpu_custom_call.1} parent=1 // pred_fallthru
      _
    // Predicated region
    $region14: #{tpu_custom_call.1} parent=1 // pred_check
      _
    $region15: #{tpu_custom_call.1} parent=1 // pred_check_branch
      %39 = sbr.rel (0) target = $region17
    $region16: #{tpu_custom_call.1} parent=1 // pred_region
      %s41 = ssub.s32 128, 128
      %42 = vsyncadd [#allocation6], %s41
      %s43 = sshll.u32 [#allocation7], 4
      %s44 = int_to_ptr.vmem [resolvable:$true] %s43
      %49 = dma.hbm_to_vmem [thread:$0]  %s3, 128, %s44, [#allocation6], 64, 64, 4
    $region17: #{tpu_custom_call.1} parent=1 // pred_fallthru
      _
    // Predicated region
    $region18: #{tpu_custom_call.1} parent=1 // pred_check
      _
    $region19: #{tpu_custom_call.1} parent=1 // pred_check_branch
      %51 = sbr.rel (0) target = $region21
    $region20: #{tpu_custom_call.1} parent=1 // pred_region
      %52 = dma.done [#allocation3], 16384
    $region21: #{tpu_custom_call.1} parent=1 // pred_fallthru
      _
    // Predicated region
    $region22: #{tpu_custom_call.1} parent=1 // pred_check
      _
    $region23: #{tpu_custom_call.1} parent=1 // pred_check_branch
      %54 = sbr.rel (0) target = $region25
    $region24: #{tpu_custom_call.1} parent=1 // pred_region
      %55 = dma.done [#allocation6], 16384
    $region25: #{tpu_custom_call.1} parent=1 // pred_fallthru
      _
    // Predicated region
    $region26: #{tpu_custom_call.1} parent=1 // pred_check
      _
    $region27: #{tpu_custom_call.1} parent=1 // pred_check_branch
      %57 = sbr.rel (0) target = $region29
    $region28: #{tpu_custom_call.1} parent=1 // pred_region
      %58 = dma.done [#allocation6], 128
    $region29: #{tpu_custom_call.1} parent=1 // pred_fallthru
      _
    %v60 = vld [vmem:[#allocation2] sm:$0xff]
    %v61 = vld [vmem:[#allocation2 + $0x8] sm:$0xff]
    %v62 = vld [vmem:[#allocation2 + $0x10] sm:$0xff]
    %v63 = vld [vmem:[#allocation2 + $0x18] sm:$0xff]
    %v64 = vld [vmem:[#allocation2 + $0x20] sm:$0xff]
    %v65 = vld [vmem:[#allocation2 + $0x28] sm:$0xff]
    %v66 = vld [vmem:[#allocation2 + $0x30] sm:$0xff]
    %v67 = vld [vmem:[#allocation2 + $0x38] sm:$0xff]
    %v68 = vld [vmem:[#allocation2 + $0x40] sm:$0xff]
    %v69 = vld [vmem:[#allocation2 + $0x48] sm:$0xff]
    %v70 = vld [vmem:[#allocation2 + $0x50] sm:$0xff]
    %v71 = vld [vmem:[#allocation2 + $0x58] sm:$0xff]
    %v72 = vld [vmem:[#allocation2 + $0x60] sm:$0xff]
    %v73 = vld [vmem:[#allocation2 + $0x68] sm:$0xff]
    %v74 = vld [vmem:[#allocation2 + $0x70] sm:$0xff]
    %v75 = vld [vmem:[#allocation2 + $0x78] sm:$0xff]
    %v76 = vld [vmem:[#allocation2 + $0x80] sm:$0xff]
    %v77 = vld [vmem:[#allocation2 + $0x88] sm:$0xff]
    %v78 = vld [vmem:[#allocation2 + $0x90] sm:$0xff]
    %v79 = vld [vmem:[#allocation2 + $0x98] sm:$0xff]
    %v80 = vld [vmem:[#allocation2 + $0xa0] sm:$0xff]
    %v81 = vld [vmem:[#allocation2 + $0xa8] sm:$0xff]
    %v82 = vld [vmem:[#allocation2 + $0xb0] sm:$0xff]
    %v83 = vld [vmem:[#allocation2 + $0xb8] sm:$0xff]
    %v84 = vld [vmem:[#allocation2 + $0xc0] sm:$0xff]
    %v85 = vld [vmem:[#allocation2 + $0xc8] sm:$0xff]
    %v86 = vld [vmem:[#allocation2 + $0xd0] sm:$0xff]
    %v87 = vld [vmem:[#allocation2 + $0xd8] sm:$0xff]
    %v88 = vld [vmem:[#allocation2 + $0xe0] sm:$0xff]
    %v89 = vld [vmem:[#allocation2 + $0xe8] sm:$0xff]
    %v90 = vld [vmem:[#allocation2 + $0xf0] sm:$0xff]
    %v91 = vld [vmem:[#allocation2 + $0xf8] sm:$0xff]
    %v92 = vld [vmem:[#allocation2 + $0x100] sm:$0xff]
    %v93 = vld [vmem:[#allocation2 + $0x108] sm:$0xff]
    %v94 = vld [vmem:[#allocation2 + $0x110] sm:$0xff]
    %v95 = vld [vmem:[#allocation2 + $0x118] sm:$0xff]
    %v96 = vld [vmem:[#allocation2 + $0x120] sm:$0xff]
    %v97 = vld [vmem:[#allocation2 + $0x128] sm:$0xff]
    %v98 = vld [vmem:[#allocation2 + $0x130] sm:$0xff]
    %v99 = vld [vmem:[#allocation2 + $0x138] sm:$0xff]
    %v100 = vld [vmem:[#allocation2 + $0x140] sm:$0xff]
    %v101 = vld [vmem:[#allocation2 + $0x148] sm:$0xff]
    %v102 = vld [vmem:[#allocation2 + $0x150] sm:$0xff]
    %v103 = vld [vmem:[#allocation2 + $0x158] sm:$0xff]
    %v104 = vld [vmem:[#allocation2 + $0x160] sm:$0xff]
    %v105 = vld [vmem:[#allocation2 + $0x168] sm:$0xff]
    %v106 = vld [vmem:[#allocation2 + $0x170] sm:$0xff]
    %v107 = vld [vmem:[#allocation2 + $0x178] sm:$0xff]
    %v108 = vld [vmem:[#allocation2 + $0x180] sm:$0xff]
    %v109 = vld [vmem:[#allocation2 + $0x188] sm:$0xff]
    %v110 = vld [vmem:[#allocation2 + $0x190] sm:$0xff]
    %v111 = vld [vmem:[#allocation2 + $0x198] sm:$0xff]
    %v112 = vld [vmem:[#allocation2 + $0x1a0] sm:$0xff]
    %v113 = vld [vmem:[#allocation2 + $0x1a8] sm:$0xff]
    %v114 = vld [vmem:[#allocation2 + $0x1b0] sm:$0xff]
    %v115 = vld [vmem:[#allocation2 + $0x1b8] sm:$0xff]
    %v116 = vld [vmem:[#allocation2 + $0x1c0] sm:$0xff]
    %v117 = vld [vmem:[#allocation2 + $0x1c8] sm:$0xff]
    %v118 = vld [vmem:[#allocation2 + $0x1d0] sm:$0xff]
    %v119 = vld [vmem:[#allocation2 + $0x1d8] sm:$0xff]
    %v120 = vld [vmem:[#allocation2 + $0x1e0] sm:$0xff]
    %v121 = vld [vmem:[#allocation2 + $0x1e8] sm:$0xff]
    %v122 = vld [vmem:[#allocation2 + $0x1f0] sm:$0xff]
    %v123 = vld [vmem:[#allocation2 + $0x1f8] sm:$0xff]
    %v124 = vld [vmem:[#allocation2 + $0x200] sm:$0xff]
    %v125 = vld [vmem:[#allocation2 + $0x208] sm:$0xff]
    %v126 = vld [vmem:[#allocation2 + $0x210] sm:$0xff]
    %v127 = vld [vmem:[#allocation2 + $0x218] sm:$0xff]
    %v128 = vld [vmem:[#allocation2 + $0x220] sm:$0xff]
    %v129 = vld [vmem:[#allocation2 + $0x228] sm:$0xff]
    %v130 = vld [vmem:[#allocation2 + $0x230] sm:$0xff]
    %v131 = vld [vmem:[#allocation2 + $0x238] sm:$0xff]
    %v132 = vld [vmem:[#allocation2 + $0x240] sm:$0xff]
    %v133 = vld [vmem:[#allocation2 + $0x248] sm:$0xff]
    %v134 = vld [vmem:[#allocation2 + $0x250] sm:$0xff]
    %v135 = vld [vmem:[#allocation2 + $0x258] sm:$0xff]
    %v136 = vld [vmem:[#allocation2 + $0x260] sm:$0xff]
    %v137 = vld [vmem:[#allocation2 + $0x268] sm:$0xff]
    %v138 = vld [vmem:[#allocation2 + $0x270] sm:$0xff]
    %v139 = vld [vmem:[#allocation2 + $0x278] sm:$0xff]
    %v140 = vld [vmem:[#allocation2 + $0x280] sm:$0xff]
    %v141 = vld [vmem:[#allocation2 + $0x288] sm:$0xff]
    %v142 = vld [vmem:[#allocation2 + $0x290] sm:$0xff]
    %v143 = vld [vmem:[#allocation2 + $0x298] sm:$0xff]
    %v144 = vld [vmem:[#allocation2 + $0x2a0] sm:$0xff]
    %v145 = vld [vmem:[#allocation2 + $0x2a8] sm:$0xff]
    %v146 = vld [vmem:[#allocation2 + $0x2b0] sm:$0xff]
    %v147 = vld [vmem:[#allocation2 + $0x2b8] sm:$0xff]
    %v148 = vld [vmem:[#allocation2 + $0x2c0] sm:$0xff]
    %v149 = vld [vmem:[#allocation2 + $0x2c8] sm:$0xff]
    %v150 = vld [vmem:[#allocation2 + $0x2d0] sm:$0xff]
    %v151 = vld [vmem:[#allocation2 + $0x2d8] sm:$0xff]
    %v152 = vld [vmem:[#allocation2 + $0x2e0] sm:$0xff]
    %v153 = vld [vmem:[#allocation2 + $0x2e8] sm:$0xff]
    %v154 = vld [vmem:[#allocation2 + $0x2f0] sm:$0xff]
    %v155 = vld [vmem:[#allocation2 + $0x2f8] sm:$0xff]
    %v156 = vld [vmem:[#allocation2 + $0x300] sm:$0xff]
    %v157 = vld [vmem:[#allocation2 + $0x308] sm:$0xff]
    %v158 = vld [vmem:[#allocation2 + $0x310] sm:$0xff]
    %v159 = vld [vmem:[#allocation2 + $0x318] sm:$0xff]
    %v160 = vld [vmem:[#allocation2 + $0x320] sm:$0xff]
    %v161 = vld [vmem:[#allocation2 + $0x328] sm:$0xff]
    %v162 = vld [vmem:[#allocation2 + $0x330] sm:$0xff]
    %v163 = vld [vmem:[#allocation2 + $0x338] sm:$0xff]
    %v164 = vld [vmem:[#allocation2 + $0x340] sm:$0xff]
    %v165 = vld [vmem:[#allocation2 + $0x348] sm:$0xff]
    %v166 = vld [vmem:[#allocation2 + $0x350] sm:$0xff]
    %v167 = vld [vmem:[#allocation2 + $0x358] sm:$0xff]
    %v168 = vld [vmem:[#allocation2 + $0x360] sm:$0xff]
    %v169 = vld [vmem:[#allocation2 + $0x368] sm:$0xff]
    %v170 = vld [vmem:[#allocation2 + $0x370] sm:$0xff]
    %v171 = vld [vmem:[#allocation2 + $0x378] sm:$0xff]
    %v172 = vld [vmem:[#allocation2 + $0x380] sm:$0xff]
    %v173 = vld [vmem:[#allocation2 + $0x388] sm:$0xff]
    %v174 = vld [vmem:[#allocation2 + $0x390] sm:$0xff]
    %v175 = vld [vmem:[#allocation2 + $0x398] sm:$0xff]
    %v176 = vld [vmem:[#allocation2 + $0x3a0] sm:$0xff]
    %v177 = vld [vmem:[#allocation2 + $0x3a8] sm:$0xff]
    %v178 = vld [vmem:[#allocation2 + $0x3b0] sm:$0xff]
    %v179 = vld [vmem:[#allocation2 + $0x3b8] sm:$0xff]
    %v180 = vld [vmem:[#allocation2 + $0x3c0] sm:$0xff]
    %v181 = vld [vmem:[#allocation2 + $0x3c8] sm:$0xff]
    %v182 = vld [vmem:[#allocation2 + $0x3d0] sm:$0xff]
    %v183 = vld [vmem:[#allocation2 + $0x3d8] sm:$0xff]
    %v184 = vld [vmem:[#allocation2 + $0x3e0] sm:$0xff]
    %v185 = vld [vmem:[#allocation2 + $0x3e8] sm:$0xff]
    %v186 = vld [vmem:[#allocation2 + $0x3f0] sm:$0xff]
    %v187 = vld [vmem:[#allocation2 + $0x3f8] sm:$0xff]
    %v188 = vld [vmem:[#allocation5] sm:$0xf]
    %v189 = vld [vmem:[#allocation5 + $0x4] sm:$0xf]
    %v190 = vld [vmem:[#allocation5 + $0x8] sm:$0xf]
    %v191 = vld [vmem:[#allocation5 + $0xc] sm:$0xf]
    %v192 = vld [vmem:[#allocation5 + $0x10] sm:$0xf]
    %v193 = vld [vmem:[#allocation5 + $0x14] sm:$0xf]
    %v194 = vld [vmem:[#allocation5 + $0x18] sm:$0xf]
    %v195 = vld [vmem:[#allocation5 + $0x1c] sm:$0xf]
    %v196 = vld [vmem:[#allocation5 + $0x20] sm:$0xf]
    %v197 = vld [vmem:[#allocation5 + $0x24] sm:$0xf]
    %v198 = vld [vmem:[#allocation5 + $0x28] sm:$0xf]
    %v199 = vld [vmem:[#allocation5 + $0x2c] sm:$0xf]
    %v200 = vld [vmem:[#allocation5 + $0x30] sm:$0xf]
    %v201 = vld [vmem:[#allocation5 + $0x34] sm:$0xf]
    %v202 = vld [vmem:[#allocation5 + $0x38] sm:$0xf]
    %v203 = vld [vmem:[#allocation5 + $0x3c] sm:$0xf]
    %v204 = vld [vmem:[#allocation5 + $0x40] sm:$0xf]
    %v205 = vld [vmem:[#allocation5 + $0x44] sm:$0xf]
    %v206 = vld [vmem:[#allocation5 + $0x48] sm:$0xf]
    %v207 = vld [vmem:[#allocation5 + $0x4c] sm:$0xf]
    %v208 = vld [vmem:[#allocation5 + $0x50] sm:$0xf]
    %v209 = vld [vmem:[#allocation5 + $0x54] sm:$0xf]
    %v210 = vld [vmem:[#allocation5 + $0x58] sm:$0xf]
    %v211 = vld [vmem:[#allocation5 + $0x5c] sm:$0xf]
    %v212 = vld [vmem:[#allocation5 + $0x60] sm:$0xf]
    %v213 = vld [vmem:[#allocation5 + $0x64] sm:$0xf]
    %v214 = vld [vmem:[#allocation5 + $0x68] sm:$0xf]
    %v215 = vld [vmem:[#allocation5 + $0x6c] sm:$0xf]
    %v216 = vld [vmem:[#allocation5 + $0x70] sm:$0xf]
    %v217 = vld [vmem:[#allocation5 + $0x74] sm:$0xf]
    %v218 = vld [vmem:[#allocation5 + $0x78] sm:$0xf]
    %v219 = vld [vmem:[#allocation5 + $0x7c] sm:$0xf]
    %v220 = vld [vmem:[#allocation5 + $0x80] sm:$0xf]
    %v221 = vld [vmem:[#allocation5 + $0x84] sm:$0xf]
    %v222 = vld [vmem:[#allocation5 + $0x88] sm:$0xf]
    %v223 = vld [vmem:[#allocation5 + $0x8c] sm:$0xf]
    %v224 = vld [vmem:[#allocation5 + $0x90] sm:$0xf]
    %v225 = vld [vmem:[#allocation5 + $0x94] sm:$0xf]
    %v226 = vld [vmem:[#allocation5 + $0x98] sm:$0xf]
    %v227 = vld [vmem:[#allocation5 + $0x9c] sm:$0xf]
    %v228 = vld [vmem:[#allocation5 + $0xa0] sm:$0xf]
    %v229 = vld [vmem:[#allocation5 + $0xa4] sm:$0xf]
    %v230 = vld [vmem:[#allocation5 + $0xa8] sm:$0xf]
    %v231 = vld [vmem:[#allocation5 + $0xac] sm:$0xf]
    %v232 = vld [vmem:[#allocation5 + $0xb0] sm:$0xf]
    %v233 = vld [vmem:[#allocation5 + $0xb4] sm:$0xf]
    %v234 = vld [vmem:[#allocation5 + $0xb8] sm:$0xf]
    %v235 = vld [vmem:[#allocation5 + $0xbc] sm:$0xf]
    %v236 = vld [vmem:[#allocation5 + $0xc0] sm:$0xf]
    %v237 = vld [vmem:[#allocation5 + $0xc4] sm:$0xf]
    %v238 = vld [vmem:[#allocation5 + $0xc8] sm:$0xf]
    %v239 = vld [vmem:[#allocation5 + $0xcc] sm:$0xf]
    %v240 = vld [vmem:[#allocation5 + $0xd0] sm:$0xf]
    %v241 = vld [vmem:[#allocation5 + $0xd4] sm:$0xf]
    %v242 = vld [vmem:[#allocation5 + $0xd8] sm:$0xf]
    %v243 = vld [vmem:[#allocation5 + $0xdc] sm:$0xf]
    %v244 = vld [vmem:[#allocation5 + $0xe0] sm:$0xf]
    %v245 = vld [vmem:[#allocation5 + $0xe4] sm:$0xf]
    %v246 = vld [vmem:[#allocation5 + $0xe8] sm:$0xf]
    %v247 = vld [vmem:[#allocation5 + $0xec] sm:$0xf]
    %v248 = vld [vmem:[#allocation5 + $0xf0] sm:$0xf]
    %v249 = vld [vmem:[#allocation5 + $0xf4] sm:$0xf]
    %v250 = vld [vmem:[#allocation5 + $0xf8] sm:$0xf]
    %v251 = vld [vmem:[#allocation5 + $0xfc] sm:$0xf]
    %v252 = vld [vmem:[#allocation5 + $0x100] sm:$0xf]
    %v253 = vld [vmem:[#allocation5 + $0x104] sm:$0xf]
    %v254 = vld [vmem:[#allocation5 + $0x108] sm:$0xf]
    %v255 = vld [vmem:[#allocation5 + $0x10c] sm:$0xf]
    %v256 = vld [vmem:[#allocation5 + $0x110] sm:$0xf]
    %v257 = vld [vmem:[#allocation5 + $0x114] sm:$0xf]
    %v258 = vld [vmem:[#allocation5 + $0x118] sm:$0xf]
    %v259 = vld [vmem:[#allocation5 + $0x11c] sm:$0xf]
    %v260 = vld [vmem:[#allocation5 + $0x120] sm:$0xf]
    %v261 = vld [vmem:[#allocation5 + $0x124] sm:$0xf]
    %v262 = vld [vmem:[#allocation5 + $0x128] sm:$0xf]
    %v263 = vld [vmem:[#allocation5 + $0x12c] sm:$0xf]
    %v264 = vld [vmem:[#allocation5 + $0x130] sm:$0xf]
    %v265 = vld [vmem:[#allocation5 + $0x134] sm:$0xf]
    %v266 = vld [vmem:[#allocation5 + $0x138] sm:$0xf]
    %v267 = vld [vmem:[#allocation5 + $0x13c] sm:$0xf]
    %v268 = vld [vmem:[#allocation5 + $0x140] sm:$0xf]
    %v269 = vld [vmem:[#allocation5 + $0x144] sm:$0xf]
    %v270 = vld [vmem:[#allocation5 + $0x148] sm:$0xf]
    %v271 = vld [vmem:[#allocation5 + $0x14c] sm:$0xf]
    %v272 = vld [vmem:[#allocation5 + $0x150] sm:$0xf]
    %v273 = vld [vmem:[#allocation5 + $0x154] sm:$0xf]
    %v274 = vld [vmem:[#allocation5 + $0x158] sm:$0xf]
    %v275 = vld [vmem:[#allocation5 + $0x15c] sm:$0xf]
    %v276 = vld [vmem:[#allocation5 + $0x160] sm:$0xf]
    %v277 = vld [vmem:[#allocation5 + $0x164] sm:$0xf]
    %v278 = vld [vmem:[#allocation5 + $0x168] sm:$0xf]
    %v279 = vld [vmem:[#allocation5 + $0x16c] sm:$0xf]
    %v280 = vld [vmem:[#allocation5 + $0x170] sm:$0xf]
    %v281 = vld [vmem:[#allocation5 + $0x174] sm:$0xf]
    %v282 = vld [vmem:[#allocation5 + $0x178] sm:$0xf]
    %v283 = vld [vmem:[#allocation5 + $0x17c] sm:$0xf]
    %v284 = vld [vmem:[#allocation5 + $0x180] sm:$0xf]
    %v285 = vld [vmem:[#allocation5 + $0x184] sm:$0xf]
    %v286 = vld [vmem:[#allocation5 + $0x188] sm:$0xf]
    %v287 = vld [vmem:[#allocation5 + $0x18c] sm:$0xf]
    %v288 = vld [vmem:[#allocation5 + $0x190] sm:$0xf]
    %v289 = vld [vmem:[#allocation5 + $0x194] sm:$0xf]
    %v290 = vld [vmem:[#allocation5 + $0x198] sm:$0xf]
    %v291 = vld [vmem:[#allocation5 + $0x19c] sm:$0xf]
    %v292 = vld [vmem:[#allocation5 + $0x1a0] sm:$0xf]
    %v293 = vld [vmem:[#allocation5 + $0x1a4] sm:$0xf]
    %v294 = vld [vmem:[#allocation5 + $0x1a8] sm:$0xf]
    %v295 = vld [vmem:[#allocation5 + $0x1ac] sm:$0xf]
    %v296 = vld [vmem:[#allocation5 + $0x1b0] sm:$0xf]
    %v297 = vld [vmem:[#allocation5 + $0x1b4] sm:$0xf]
    %v298 = vld [vmem:[#allocation5 + $0x1b8] sm:$0xf]
    %v299 = vld [vmem:[#allocation5 + $0x1bc] sm:$0xf]
    %v300 = vld [vmem:[#allocation5 + $0x1c0] sm:$0xf]
    %v301 = vld [vmem:[#allocation5 + $0x1c4] sm:$0xf]
    %v302 = vld [vmem:[#allocation5 + $0x1c8] sm:$0xf]
    %v303 = vld [vmem:[#allocation5 + $0x1cc] sm:$0xf]
    %v304 = vld [vmem:[#allocation5 + $0x1d0] sm:$0xf]
    %v305 = vld [vmem:[#allocation5 + $0x1d4] sm:$0xf]
    %v306 = vld [vmem:[#allocation5 + $0x1d8] sm:$0xf]
    %v307 = vld [vmem:[#allocation5 + $0x1dc] sm:$0xf]
    %v308 = vld [vmem:[#allocation5 + $0x1e0] sm:$0xf]
    %v309 = vld [vmem:[#allocation5 + $0x1e4] sm:$0xf]
    %v310 = vld [vmem:[#allocation5 + $0x1e8] sm:$0xf]
    %v311 = vld [vmem:[#allocation5 + $0x1ec] sm:$0xf]
    %v312 = vld [vmem:[#allocation5 + $0x1f0] sm:$0xf]
    %v313 = vld [vmem:[#allocation5 + $0x1f4] sm:$0xf]
    %v314 = vld [vmem:[#allocation5 + $0x1f8] sm:$0xf]
    %v315 = vld [vmem:[#allocation5 + $0x1fc] sm:$0xf]
    %v316 = vld [vmem:[#allocation5 + $0x200] sm:$0xf]
    %v317 = vld [vmem:[#allocation5 + $0x204] sm:$0xf]
    %v318 = vld [vmem:[#allocation5 + $0x208] sm:$0xf]
    %v319 = vld [vmem:[#allocation5 + $0x20c] sm:$0xf]
    %v320 = vld [vmem:[#allocation5 + $0x210] sm:$0xf]
    %v321 = vld [vmem:[#allocation5 + $0x214] sm:$0xf]
    %v322 = vld [vmem:[#allocation5 + $0x218] sm:$0xf]
    %v323 = vld [vmem:[#allocation5 + $0x21c] sm:$0xf]
    %v324 = vld [vmem:[#allocation5 + $0x220] sm:$0xf]
    %v325 = vld [vmem:[#allocation5 + $0x224] sm:$0xf]
    %v326 = vld [vmem:[#allocation5 + $0x228] sm:$0xf]
    %v327 = vld [vmem:[#allocation5 + $0x22c] sm:$0xf]
    %v328 = vld [vmem:[#allocation5 + $0x230] sm:$0xf]
    %v329 = vld [vmem:[#allocation5 + $0x234] sm:$0xf]
    %v330 = vld [vmem:[#allocation5 + $0x238] sm:$0xf]
    %v331 = vld [vmem:[#allocation5 + $0x23c] sm:$0xf]
    %v332 = vld [vmem:[#allocation5 + $0x240] sm:$0xf]
    %v333 = vld [vmem:[#allocation5 + $0x244] sm:$0xf]
    %v334 = vld [vmem:[#allocation5 + $0x248] sm:$0xf]
    %v335 = vld [vmem:[#allocation5 + $0x24c] sm:$0xf]
    %v336 = vld [vmem:[#allocation5 + $0x250] sm:$0xf]
    %v337 = vld [vmem:[#allocation5 + $0x254] sm:$0xf]
    %v338 = vld [vmem:[#allocation5 + $0x258] sm:$0xf]
    %v339 = vld [vmem:[#allocation5 + $0x25c] sm:$0xf]
    %v340 = vld [vmem:[#allocation5 + $0x260] sm:$0xf]
    %v341 = vld [vmem:[#allocation5 + $0x264] sm:$0xf]
    %v342 = vld [vmem:[#allocation5 + $0x268] sm:$0xf]
    %v343 = vld [vmem:[#allocation5 + $0x26c] sm:$0xf]
    %v344 = vld [vmem:[#allocation5 + $0x270] sm:$0xf]
    %v345 = vld [vmem:[#allocation5 + $0x274] sm:$0xf]
    %v346 = vld [vmem:[#allocation5 + $0x278] sm:$0xf]
    %v347 = vld [vmem:[#allocation5 + $0x27c] sm:$0xf]
    %v348 = vld [vmem:[#allocation5 + $0x280] sm:$0xf]
    %v349 = vld [vmem:[#allocation5 + $0x284] sm:$0xf]
    %v350 = vld [vmem:[#allocation5 + $0x288] sm:$0xf]
    %v351 = vld [vmem:[#allocation5 + $0x28c] sm:$0xf]
    %v352 = vld [vmem:[#allocation5 + $0x290] sm:$0xf]
    %v353 = vld [vmem:[#allocation5 + $0x294] sm:$0xf]
    %v354 = vld [vmem:[#allocation5 + $0x298] sm:$0xf]
    %v355 = vld [vmem:[#allocation5 + $0x29c] sm:$0xf]
    %v356 = vld [vmem:[#allocation5 + $0x2a0] sm:$0xf]
    %v357 = vld [vmem:[#allocation5 + $0x2a4] sm:$0xf]
    %v358 = vld [vmem:[#allocation5 + $0x2a8] sm:$0xf]
    %v359 = vld [vmem:[#allocation5 + $0x2ac] sm:$0xf]
    %v360 = vld [vmem:[#allocation5 + $0x2b0] sm:$0xf]
    %v361 = vld [vmem:[#allocation5 + $0x2b4] sm:$0xf]
    %v362 = vld [vmem:[#allocation5 + $0x2b8] sm:$0xf]
    %v363 = vld [vmem:[#allocation5 + $0x2bc] sm:$0xf]
    %v364 = vld [vmem:[#allocation5 + $0x2c0] sm:$0xf]
    %v365 = vld [vmem:[#allocation5 + $0x2c4] sm:$0xf]
    %v366 = vld [vmem:[#allocation5 + $0x2c8] sm:$0xf]
    %v367 = vld [vmem:[#allocation5 + $0x2cc] sm:$0xf]
    %v368 = vld [vmem:[#allocation5 + $0x2d0] sm:$0xf]
    %v369 = vld [vmem:[#allocation5 + $0x2d4] sm:$0xf]
    %v370 = vld [vmem:[#allocation5 + $0x2d8] sm:$0xf]
    %v371 = vld [vmem:[#allocation5 + $0x2dc] sm:$0xf]
    %v372 = vld [vmem:[#allocation5 + $0x2e0] sm:$0xf]
    %v373 = vld [vmem:[#allocation5 + $0x2e4] sm:$0xf]
    %v374 = vld [vmem:[#allocation5 + $0x2e8] sm:$0xf]
    %v375 = vld [vmem:[#allocation5 + $0x2ec] sm:$0xf]
    %v376 = vld [vmem:[#allocation5 + $0x2f0] sm:$0xf]
    %v377 = vld [vmem:[#allocation5 + $0x2f4] sm:$0xf]
    %v378 = vld [vmem:[#allocation5 + $0x2f8] sm:$0xf]
    %v379 = vld [vmem:[#allocation5 + $0x2fc] sm:$0xf]
    %v380 = vld [vmem:[#allocation5 + $0x300] sm:$0xf]
    %v381 = vld [vmem:[#allocation5 + $0x304] sm:$0xf]
    %v382 = vld [vmem:[#allocation5 + $0x308] sm:$0xf]
    %v383 = vld [vmem:[#allocation5 + $0x30c] sm:$0xf]
    %v384 = vld [vmem:[#allocation5 + $0x310] sm:$0xf]
    %v385 = vld [vmem:[#allocation5 + $0x314] sm:$0xf]
    %v386 = vld [vmem:[#allocation5 + $0x318] sm:$0xf]
    %v387 = vld [vmem:[#allocation5 + $0x31c] sm:$0xf]
    %v388 = vld [vmem:[#allocation5 + $0x320] sm:$0xf]
    %v389 = vld [vmem:[#allocation5 + $0x324] sm:$0xf]
    %v390 = vld [vmem:[#allocation5 + $0x328] sm:$0xf]
    %v391 = vld [vmem:[#allocation5 + $0x32c] sm:$0xf]
    %v392 = vld [vmem:[#allocation5 + $0x330] sm:$0xf]
    %v393 = vld [vmem:[#allocation5 + $0x334] sm:$0xf]
    %v394 = vld [vmem:[#allocation5 + $0x338] sm:$0xf]
    %v395 = vld [vmem:[#allocation5 + $0x33c] sm:$0xf]
    %v396 = vld [vmem:[#allocation5 + $0x340] sm:$0xf]
    %v397 = vld [vmem:[#allocation5 + $0x344] sm:$0xf]
    %v398 = vld [vmem:[#allocation5 + $0x348] sm:$0xf]
    %v399 = vld [vmem:[#allocation5 + $0x34c] sm:$0xf]
    %v400 = vld [vmem:[#allocation5 + $0x350] sm:$0xf]
    %v401 = vld [vmem:[#allocation5 + $0x354] sm:$0xf]
    %v402 = vld [vmem:[#allocation5 + $0x358] sm:$0xf]
    %v403 = vld [vmem:[#allocation5 + $0x35c] sm:$0xf]
    %v404 = vld [vmem:[#allocation5 + $0x360] sm:$0xf]
    %v405 = vld [vmem:[#allocation5 + $0x364] sm:$0xf]
    %v406 = vld [vmem:[#allocation5 + $0x368] sm:$0xf]
    %v407 = vld [vmem:[#allocation5 + $0x36c] sm:$0xf]
    %v408 = vld [vmem:[#allocation5 + $0x370] sm:$0xf]
    %v409 = vld [vmem:[#allocation5 + $0x374] sm:$0xf]
    %v410 = vld [vmem:[#allocation5 + $0x378] sm:$0xf]
    %v411 = vld [vmem:[#allocation5 + $0x37c] sm:$0xf]
    %v412 = vld [vmem:[#allocation5 + $0x380] sm:$0xf]
    %v413 = vld [vmem:[#allocation5 + $0x384] sm:$0xf]
    %v414 = vld [vmem:[#allocation5 + $0x388] sm:$0xf]
    %v415 = vld [vmem:[#allocation5 + $0x38c] sm:$0xf]
    %v416 = vld [vmem:[#allocation5 + $0x390] sm:$0xf]
    %v417 = vld [vmem:[#allocation5 + $0x394] sm:$0xf]
    %v418 = vld [vmem:[#allocation5 + $0x398] sm:$0xf]
    %v419 = vld [vmem:[#allocation5 + $0x39c] sm:$0xf]
    %v420 = vld [vmem:[#allocation5 + $0x3a0] sm:$0xf]
    %v421 = vld [vmem:[#allocation5 + $0x3a4] sm:$0xf]
    %v422 = vld [vmem:[#allocation5 + $0x3a8] sm:$0xf]
    %v423 = vld [vmem:[#allocation5 + $0x3ac] sm:$0xf]
    %v424 = vld [vmem:[#allocation5 + $0x3b0] sm:$0xf]
    %v425 = vld [vmem:[#allocation5 + $0x3b4] sm:$0xf]
    %v426 = vld [vmem:[#allocation5 + $0x3b8] sm:$0xf]
    %v427 = vld [vmem:[#allocation5 + $0x3bc] sm:$0xf]
    %v428 = vld [vmem:[#allocation5 + $0x3c0] sm:$0xf]
    %v429 = vld [vmem:[#allocation5 + $0x3c4] sm:$0xf]
    %v430 = vld [vmem:[#allocation5 + $0x3c8] sm:$0xf]
    %v431 = vld [vmem:[#allocation5 + $0x3cc] sm:$0xf]
    %v432 = vld [vmem:[#allocation5 + $0x3d0] sm:$0xf]
    %v433 = vld [vmem:[#allocation5 + $0x3d4] sm:$0xf]
    %v434 = vld [vmem:[#allocation5 + $0x3d8] sm:$0xf]
    %v435 = vld [vmem:[#allocation5 + $0x3dc] sm:$0xf]
    %v436 = vld [vmem:[#allocation5 + $0x3e0] sm:$0xf]
    %v437 = vld [vmem:[#allocation5 + $0x3e4] sm:$0xf]
    %v438 = vld [vmem:[#allocation5 + $0x3e8] sm:$0xf]
    %v439 = vld [vmem:[#allocation5 + $0x3ec] sm:$0xf]
    %v440 = vld [vmem:[#allocation5 + $0x3f0] sm:$0xf]
    %v441 = vld [vmem:[#allocation5 + $0x3f4] sm:$0xf]
    %v442 = vld [vmem:[#allocation5 + $0x3f8] sm:$0xf]
    %v443 = vld [vmem:[#allocation5 + $0x3fc] sm:$0xf]
    %v444 = vld [vmem:[%s2] sm:$0x1]
    %v446 = vlaneseq
    %v447 = vshrl.u32 %v446, 7
    %v448 = vsub.s32 0, %v447
    %v449 = vrot.slane %v444, %v448
    %v579 = vunpack.c.l.b16 %v60
    %v580 = vunpack.c.h.b16 %v60
    %v581 = vunpack.c.l.b16 %v61
    %v582 = vunpack.c.h.b16 %v61
    %v583 = vunpack.c.l.b16 %v62
    %v584 = vunpack.c.h.b16 %v62
    %v585 = vunpack.c.l.b16 %v63
    %v586 = vunpack.c.h.b16 %v63
    %v587 = vunpack.c.l.b16 %v64
    %v588 = vunpack.c.h.b16 %v64
    %v589 = vunpack.c.l.b16 %v65
    %v590 = vunpack.c.h.b16 %v65
    %v591 = vunpack.c.l.b16 %v66
    %v592 = vunpack.c.h.b16 %v66
    %v593 = vunpack.c.l.b16 %v67
    %v594 = vunpack.c.h.b16 %v67
    %v595 = vunpack.c.l.b16 %v68
    %v596 = vunpack.c.h.b16 %v68
    %v597 = vunpack.c.l.b16 %v69
    %v598 = vunpack.c.h.b16 %v69
    %v599 = vunpack.c.l.b16 %v70
    %v600 = vunpack.c.h.b16 %v70
    %v601 = vunpack.c.l.b16 %v71
    %v602 = vunpack.c.h.b16 %v71
    %v603 = vunpack.c.l.b16 %v72
    %v604 = vunpack.c.h.b16 %v72
    %v605 = vunpack.c.l.b16 %v73
    %v606 = vunpack.c.h.b16 %v73
    %v607 = vunpack.c.l.b16 %v74
    %v608 = vunpack.c.h.b16 %v74
    %v609 = vunpack.c.l.b16 %v75
    %v610 = vunpack.c.h.b16 %v75
    %v611 = vunpack.c.l.b16 %v76
    %v612 = vunpack.c.h.b16 %v76
    %v613 = vunpack.c.l.b16 %v77
    %v614 = vunpack.c.h.b16 %v77
    %v615 = vunpack.c.l.b16 %v78
    %v616 = vunpack.c.h.b16 %v78
    %v617 = vunpack.c.l.b16 %v79
    %v618 = vunpack.c.h.b16 %v79
    %v619 = vunpack.c.l.b16 %v80
    %v620 = vunpack.c.h.b16 %v80
    %v621 = vunpack.c.l.b16 %v81
    %v622 = vunpack.c.h.b16 %v81
    %v623 = vunpack.c.l.b16 %v82
    %v624 = vunpack.c.h.b16 %v82
    %v625 = vunpack.c.l.b16 %v83
    %v626 = vunpack.c.h.b16 %v83
    %v627 = vunpack.c.l.b16 %v84
    %v628 = vunpack.c.h.b16 %v84
    %v629 = vunpack.c.l.b16 %v85
    %v630 = vunpack.c.h.b16 %v85
    %v631 = vunpack.c.l.b16 %v86
    %v632 = vunpack.c.h.b16 %v86
    %v633 = vunpack.c.l.b16 %v87
    %v634 = vunpack.c.h.b16 %v87
    %v635 = vunpack.c.l.b16 %v88
    %v636 = vunpack.c.h.b16 %v88
    %v637 = vunpack.c.l.b16 %v89
    %v638 = vunpack.c.h.b16 %v89
    %v639 = vunpack.c.l.b16 %v90
    %v640 = vunpack.c.h.b16 %v90
    %v641 = vunpack.c.l.b16 %v91
    %v642 = vunpack.c.h.b16 %v91
    %v643 = vunpack.c.l.b16 %v92
    %v644 = vunpack.c.h.b16 %v92
    %v645 = vunpack.c.l.b16 %v93
    %v646 = vunpack.c.h.b16 %v93
    %v647 = vunpack.c.l.b16 %v94
    %v648 = vunpack.c.h.b16 %v94
    %v649 = vunpack.c.l.b16 %v95
    %v650 = vunpack.c.h.b16 %v95
    %v651 = vunpack.c.l.b16 %v96
    %v652 = vunpack.c.h.b16 %v96
    %v653 = vunpack.c.l.b16 %v97
    %v654 = vunpack.c.h.b16 %v97
    %v655 = vunpack.c.l.b16 %v98
    %v656 = vunpack.c.h.b16 %v98
    %v657 = vunpack.c.l.b16 %v99
    %v658 = vunpack.c.h.b16 %v99
    %v659 = vunpack.c.l.b16 %v100
    %v660 = vunpack.c.h.b16 %v100
    %v661 = vunpack.c.l.b16 %v101
    %v662 = vunpack.c.h.b16 %v101
    %v663 = vunpack.c.l.b16 %v102
    %v664 = vunpack.c.h.b16 %v102
    %v665 = vunpack.c.l.b16 %v103
    %v666 = vunpack.c.h.b16 %v103
    %v667 = vunpack.c.l.b16 %v104
    %v668 = vunpack.c.h.b16 %v104
    %v669 = vunpack.c.l.b16 %v105
    %v670 = vunpack.c.h.b16 %v105
    %v671 = vunpack.c.l.b16 %v106
    %v672 = vunpack.c.h.b16 %v106
    %v673 = vunpack.c.l.b16 %v107
    %v674 = vunpack.c.h.b16 %v107
    %v675 = vunpack.c.l.b16 %v108
    %v676 = vunpack.c.h.b16 %v108
    %v677 = vunpack.c.l.b16 %v109
    %v678 = vunpack.c.h.b16 %v109
    %v679 = vunpack.c.l.b16 %v110
    %v680 = vunpack.c.h.b16 %v110
    %v681 = vunpack.c.l.b16 %v111
    %v682 = vunpack.c.h.b16 %v111
    %v683 = vunpack.c.l.b16 %v112
    %v684 = vunpack.c.h.b16 %v112
    %v685 = vunpack.c.l.b16 %v113
    %v686 = vunpack.c.h.b16 %v113
    %v687 = vunpack.c.l.b16 %v114
    %v688 = vunpack.c.h.b16 %v114
    %v689 = vunpack.c.l.b16 %v115
    %v690 = vunpack.c.h.b16 %v115
    %v691 = vunpack.c.l.b16 %v116
    %v692 = vunpack.c.h.b16 %v116
    %v693 = vunpack.c.l.b16 %v117
    %v694 = vunpack.c.h.b16 %v117
    %v695 = vunpack.c.l.b16 %v118
    %v696 = vunpack.c.h.b16 %v118
    %v697 = vunpack.c.l.b16 %v119
    %v698 = vunpack.c.h.b16 %v119
    %v699 = vunpack.c.l.b16 %v120
    %v700 = vunpack.c.h.b16 %v120
    %v701 = vunpack.c.l.b16 %v121
    %v702 = vunpack.c.h.b16 %v121
    %v703 = vunpack.c.l.b16 %v122
    %v704 = vunpack.c.h.b16 %v122
    %v705 = vunpack.c.l.b16 %v123
    %v706 = vunpack.c.h.b16 %v123
    %v707 = vunpack.c.l.b16 %v124
    %v708 = vunpack.c.h.b16 %v124
    %v709 = vunpack.c.l.b16 %v125
    %v710 = vunpack.c.h.b16 %v125
    %v711 = vunpack.c.l.b16 %v126
    %v712 = vunpack.c.h.b16 %v126
    %v713 = vunpack.c.l.b16 %v127
    %v714 = vunpack.c.h.b16 %v127
    %v715 = vunpack.c.l.b16 %v128
    %v716 = vunpack.c.h.b16 %v128
    %v717 = vunpack.c.l.b16 %v129
    %v718 = vunpack.c.h.b16 %v129
    %v719 = vunpack.c.l.b16 %v130
    %v720 = vunpack.c.h.b16 %v130
    %v721 = vunpack.c.l.b16 %v131
    %v722 = vunpack.c.h.b16 %v131
    %v723 = vunpack.c.l.b16 %v132
    %v724 = vunpack.c.h.b16 %v132
    %v725 = vunpack.c.l.b16 %v133
    %v726 = vunpack.c.h.b16 %v133
    %v727 = vunpack.c.l.b16 %v134
    %v728 = vunpack.c.h.b16 %v134
    %v729 = vunpack.c.l.b16 %v135
    %v730 = vunpack.c.h.b16 %v135
    %v731 = vunpack.c.l.b16 %v136
    %v732 = vunpack.c.h.b16 %v136
    %v733 = vunpack.c.l.b16 %v137
    %v734 = vunpack.c.h.b16 %v137
    %v735 = vunpack.c.l.b16 %v138
    %v736 = vunpack.c.h.b16 %v138
    %v737 = vunpack.c.l.b16 %v139
    %v738 = vunpack.c.h.b16 %v139
    %v739 = vunpack.c.l.b16 %v140
    %v740 = vunpack.c.h.b16 %v140
    %v741 = vunpack.c.l.b16 %v141
    %v742 = vunpack.c.h.b16 %v141
    %v743 = vunpack.c.l.b16 %v142
    %v744 = vunpack.c.h.b16 %v142
    %v745 = vunpack.c.l.b16 %v143
    %v746 = vunpack.c.h.b16 %v143
    %v747 = vunpack.c.l.b16 %v144
    %v748 = vunpack.c.h.b16 %v144
    %v749 = vunpack.c.l.b16 %v145
    %v750 = vunpack.c.h.b16 %v145
    %v751 = vunpack.c.l.b16 %v146
    %v752 = vunpack.c.h.b16 %v146
    %v753 = vunpack.c.l.b16 %v147
    %v754 = vunpack.c.h.b16 %v147
    %v755 = vunpack.c.l.b16 %v148
    %v756 = vunpack.c.h.b16 %v148
    %v757 = vunpack.c.l.b16 %v149
    %v758 = vunpack.c.h.b16 %v149
    %v759 = vunpack.c.l.b16 %v150
    %v760 = vunpack.c.h.b16 %v150
    %v761 = vunpack.c.l.b16 %v151
    %v762 = vunpack.c.h.b16 %v151
    %v763 = vunpack.c.l.b16 %v152
    %v764 = vunpack.c.h.b16 %v152
    %v765 = vunpack.c.l.b16 %v153
    %v766 = vunpack.c.h.b16 %v153
    %v767 = vunpack.c.l.b16 %v154
    %v768 = vunpack.c.h.b16 %v154
    %v769 = vunpack.c.l.b16 %v155
    %v770 = vunpack.c.h.b16 %v155
    %v771 = vunpack.c.l.b16 %v156
    %v772 = vunpack.c.h.b16 %v156
    %v773 = vunpack.c.l.b16 %v157
    %v774 = vunpack.c.h.b16 %v157
    %v775 = vunpack.c.l.b16 %v158
    %v776 = vunpack.c.h.b16 %v158
    %v777 = vunpack.c.l.b16 %v159
    %v778 = vunpack.c.h.b16 %v159
    %v779 = vunpack.c.l.b16 %v160
    %v780 = vunpack.c.h.b16 %v160
    %v781 = vunpack.c.l.b16 %v161
    %v782 = vunpack.c.h.b16 %v161
    %v783 = vunpack.c.l.b16 %v162
    %v784 = vunpack.c.h.b16 %v162
    %v785 = vunpack.c.l.b16 %v163
    %v786 = vunpack.c.h.b16 %v163
    %v787 = vunpack.c.l.b16 %v164
    %v788 = vunpack.c.h.b16 %v164
    %v789 = vunpack.c.l.b16 %v165
    %v790 = vunpack.c.h.b16 %v165
    %v791 = vunpack.c.l.b16 %v166
    %v792 = vunpack.c.h.b16 %v166
    %v793 = vunpack.c.l.b16 %v167
    %v794 = vunpack.c.h.b16 %v167
    %v795 = vunpack.c.l.b16 %v168
    %v796 = vunpack.c.h.b16 %v168
    %v797 = vunpack.c.l.b16 %v169
    %v798 = vunpack.c.h.b16 %v169
    %v799 = vunpack.c.l.b16 %v170
    %v800 = vunpack.c.h.b16 %v170
    %v801 = vunpack.c.l.b16 %v171
    %v802 = vunpack.c.h.b16 %v171
    %v803 = vunpack.c.l.b16 %v172
    %v804 = vunpack.c.h.b16 %v172
    %v805 = vunpack.c.l.b16 %v173
    %v806 = vunpack.c.h.b16 %v173
    %v807 = vunpack.c.l.b16 %v174
    %v808 = vunpack.c.h.b16 %v174
    %v809 = vunpack.c.l.b16 %v175
    %v810 = vunpack.c.h.b16 %v175
    %v811 = vunpack.c.l.b16 %v176
    %v812 = vunpack.c.h.b16 %v176
    %v813 = vunpack.c.l.b16 %v177
    %v814 = vunpack.c.h.b16 %v177
    %v815 = vunpack.c.l.b16 %v178
    %v816 = vunpack.c.h.b16 %v178
    %v817 = vunpack.c.l.b16 %v179
    %v818 = vunpack.c.h.b16 %v179
    %v819 = vunpack.c.l.b16 %v180
    %v820 = vunpack.c.h.b16 %v180
    %v821 = vunpack.c.l.b16 %v181
    %v822 = vunpack.c.h.b16 %v181
    %v823 = vunpack.c.l.b16 %v182
    %v824 = vunpack.c.h.b16 %v182
    %v825 = vunpack.c.l.b16 %v183
    %v826 = vunpack.c.h.b16 %v183
    %v827 = vunpack.c.l.b16 %v184
    %v828 = vunpack.c.h.b16 %v184
    %v829 = vunpack.c.l.b16 %v185
    %v830 = vunpack.c.h.b16 %v185
    %v831 = vunpack.c.l.b16 %v186
    %v832 = vunpack.c.h.b16 %v186
    %v833 = vunpack.c.l.b16 %v187
    %v834 = vunpack.c.h.b16 %v187
    %v835 = vpack.c.b16 %v595, %v579
    %v836 = vpack.c.b16 %v596, %v580
    %v837 = vpack.c.b16 %v597, %v581
    %v838 = vpack.c.b16 %v598, %v582
    %v839 = vpack.c.b16 %v599, %v583
    %v840 = vpack.c.b16 %v600, %v584
    %v841 = vpack.c.b16 %v601, %v585
    %v842 = vpack.c.b16 %v602, %v586
    %v843 = vpack.c.b16 %v603, %v587
    %v844 = vpack.c.b16 %v604, %v588
    %v845 = vpack.c.b16 %v605, %v589
    %v846 = vpack.c.b16 %v606, %v590
    %v847 = vpack.c.b16 %v607, %v591
    %v848 = vpack.c.b16 %v608, %v592
    %v849 = vpack.c.b16 %v609, %v593
    %v850 = vpack.c.b16 %v610, %v594
    %v851 = vpack.c.b16 %v627, %v611
    %v852 = vpack.c.b16 %v628, %v612
    %v853 = vpack.c.b16 %v629, %v613
    %v854 = vpack.c.b16 %v630, %v614
    %v855 = vpack.c.b16 %v631, %v615
    %v856 = vpack.c.b16 %v632, %v616
    %v857 = vpack.c.b16 %v633, %v617
    %v858 = vpack.c.b16 %v634, %v618
    %v859 = vpack.c.b16 %v635, %v619
    %v860 = vpack.c.b16 %v636, %v620
    %v861 = vpack.c.b16 %v637, %v621
    %v862 = vpack.c.b16 %v638, %v622
    %v863 = vpack.c.b16 %v639, %v623
    %v864 = vpack.c.b16 %v640, %v624
    %v865 = vpack.c.b16 %v641, %v625
    %v866 = vpack.c.b16 %v642, %v626
    %v867 = vpack.c.b16 %v659, %v643
    %v868 = vpack.c.b16 %v660, %v644
    %v869 = vpack.c.b16 %v661, %v645
    %v870 = vpack.c.b16 %v662, %v646
    %v871 = vpack.c.b16 %v663, %v647
    %v872 = vpack.c.b16 %v664, %v648
    %v873 = vpack.c.b16 %v665, %v649
    %v874 = vpack.c.b16 %v666, %v650
    %v875 = vpack.c.b16 %v667, %v651
    %v876 = vpack.c.b16 %v668, %v652
    %v877 = vpack.c.b16 %v669, %v653
    %v878 = vpack.c.b16 %v670, %v654
    %v879 = vpack.c.b16 %v671, %v655
    %v880 = vpack.c.b16 %v672, %v656
    %v881 = vpack.c.b16 %v673, %v657
    %v882 = vpack.c.b16 %v674, %v658
    %v883 = vpack.c.b16 %v691, %v675
    %v884 = vpack.c.b16 %v692, %v676
    %v885 = vpack.c.b16 %v693, %v677
    %v886 = vpack.c.b16 %v694, %v678
    %v887 = vpack.c.b16 %v695, %v679
    %v888 = vpack.c.b16 %v696, %v680
    %v889 = vpack.c.b16 %v697, %v681
    %v890 = vpack.c.b16 %v698, %v682
    %v891 = vpack.c.b16 %v699, %v683
    %v892 = vpack.c.b16 %v700, %v684
    %v893 = vpack.c.b16 %v701, %v685
    %v894 = vpack.c.b16 %v702, %v686
    %v895 = vpack.c.b16 %v703, %v687
    %v896 = vpack.c.b16 %v704, %v688
    %v897 = vpack.c.b16 %v705, %v689
    %v898 = vpack.c.b16 %v706, %v690
    %v899 = vpack.c.b16 %v723, %v707
    %v900 = vpack.c.b16 %v724, %v708
    %v901 = vpack.c.b16 %v725, %v709
    %v902 = vpack.c.b16 %v726, %v710
    %v903 = vpack.c.b16 %v727, %v711
    %v904 = vpack.c.b16 %v728, %v712
    %v905 = vpack.c.b16 %v729, %v713
    %v906 = vpack.c.b16 %v730, %v714
    %v907 = vpack.c.b16 %v731, %v715
    %v908 = vpack.c.b16 %v732, %v716
    %v909 = vpack.c.b16 %v733, %v717
    %v910 = vpack.c.b16 %v734, %v718
    %v911 = vpack.c.b16 %v735, %v719
    %v912 = vpack.c.b16 %v736, %v720
    %v913 = vpack.c.b16 %v737, %v721
    %v914 = vpack.c.b16 %v738, %v722
    %v915 = vpack.c.b16 %v755, %v739
    %v916 = vpack.c.b16 %v756, %v740
    %v917 = vpack.c.b16 %v757, %v741
    %v918 = vpack.c.b16 %v758, %v742
    %v919 = vpack.c.b16 %v759, %v743
    %v920 = vpack.c.b16 %v760, %v744
    %v921 = vpack.c.b16 %v761, %v745
    %v922 = vpack.c.b16 %v762, %v746
    %v923 = vpack.c.b16 %v763, %v747
    %v924 = vpack.c.b16 %v764, %v748
    %v925 = vpack.c.b16 %v765, %v749
    %v926 = vpack.c.b16 %v766, %v750
    %v927 = vpack.c.b16 %v767, %v751
    %v928 = vpack.c.b16 %v768, %v752
    %v929 = vpack.c.b16 %v769, %v753
    %v930 = vpack.c.b16 %v770, %v754
    %v931 = vpack.c.b16 %v787, %v771
    %v932 = vpack.c.b16 %v788, %v772
    %v933 = vpack.c.b16 %v789, %v773
    %v934 = vpack.c.b16 %v790, %v774
    %v935 = vpack.c.b16 %v791, %v775
    %v936 = vpack.c.b16 %v792, %v776
    %v937 = vpack.c.b16 %v793, %v777
    %v938 = vpack.c.b16 %v794, %v778
    %v939 = vpack.c.b16 %v795, %v779
    %v940 = vpack.c.b16 %v796, %v780
    %v941 = vpack.c.b16 %v797, %v781
    %v942 = vpack.c.b16 %v798, %v782
    %v943 = vpack.c.b16 %v799, %v783
    %v944 = vpack.c.b16 %v800, %v784
    %v945 = vpack.c.b16 %v801, %v785
    %v946 = vpack.c.b16 %v802, %v786
    %v947 = vpack.c.b16 %v819, %v803
    %v948 = vpack.c.b16 %v820, %v804
    %v949 = vpack.c.b16 %v821, %v805
    %v950 = vpack.c.b16 %v822, %v806
    %v951 = vpack.c.b16 %v823, %v807
    %v952 = vpack.c.b16 %v824, %v808
    %v953 = vpack.c.b16 %v825, %v809
    %v954 = vpack.c.b16 %v826, %v810
    %v955 = vpack.c.b16 %v827, %v811
    %v956 = vpack.c.b16 %v828, %v812
    %v957 = vpack.c.b16 %v829, %v813
    %v958 = vpack.c.b16 %v830, %v814
    %v959 = vpack.c.b16 %v831, %v815
    %v960 = vpack.c.b16 %v832, %v816
    %v961 = vpack.c.b16 %v833, %v817
    %v962 = vpack.c.b16 %v834, %v818
    %v1347 = vunpack.c.l.b16 %v188
    %v1348 = vunpack.c.l.b16 %v189
    %v1349 = vunpack.c.l.b16 %v190
    %v1350 = vunpack.c.l.b16 %v191
    %v1351 = vunpack.c.l.b16 %v192
    %v1352 = vunpack.c.l.b16 %v193
    %v1353 = vunpack.c.l.b16 %v194
    %v1354 = vunpack.c.l.b16 %v195
    %v1355 = vunpack.c.l.b16 %v196
    %v1356 = vunpack.c.l.b16 %v197
    %v1357 = vunpack.c.l.b16 %v198
    %v1358 = vunpack.c.l.b16 %v199
    %v1359 = vunpack.c.l.b16 %v200
    %v1360 = vunpack.c.l.b16 %v201
    %v1361 = vunpack.c.l.b16 %v202
    %v1362 = vunpack.c.l.b16 %v203
    %v1363 = vunpack.c.l.b16 %v204
    %v1364 = vunpack.c.l.b16 %v205
    %v1365 = vunpack.c.l.b16 %v206
    %v1366 = vunpack.c.l.b16 %v207
    %v1367 = vunpack.c.l.b16 %v208
    %v1368 = vunpack.c.l.b16 %v209
    %v1369 = vunpack.c.l.b16 %v210
    %v1370 = vunpack.c.l.b16 %v211
    %v1371 = vunpack.c.l.b16 %v212
    %v1372 = vunpack.c.l.b16 %v213
    %v1373 = vunpack.c.l.b16 %v214
    %v1374 = vunpack.c.l.b16 %v215
    %v1375 = vunpack.c.l.b16 %v216
    %v1376 = vunpack.c.l.b16 %v217
    %v1377 = vunpack.c.l.b16 %v218
    %v1378 = vunpack.c.l.b16 %v219
    %v1379 = vunpack.c.l.b16 %v220
    %v1380 = vunpack.c.l.b16 %v221
    %v1381 = vunpack.c.l.b16 %v222
    %v1382 = vunpack.c.l.b16 %v223
    %v1383 = vunpack.c.l.b16 %v224
    %v1384 = vunpack.c.l.b16 %v225
    %v1385 = vunpack.c.l.b16 %v226
    %v1386 = vunpack.c.l.b16 %v227
    %v1387 = vunpack.c.l.b16 %v228
    %v1388 = vunpack.c.l.b16 %v229
    %v1389 = vunpack.c.l.b16 %v230
    %v1390 = vunpack.c.l.b16 %v231
    %v1391 = vunpack.c.l.b16 %v232
    %v1392 = vunpack.c.l.b16 %v233
    %v1393 = vunpack.c.l.b16 %v234
    %v1394 = vunpack.c.l.b16 %v235
    %v1395 = vunpack.c.l.b16 %v236
    %v1396 = vunpack.c.l.b16 %v237
    %v1397 = vunpack.c.l.b16 %v238
    %v1398 = vunpack.c.l.b16 %v239
    %v1399 = vunpack.c.l.b16 %v240
    %v1400 = vunpack.c.l.b16 %v241
    %v1401 = vunpack.c.l.b16 %v242
    %v1402 = vunpack.c.l.b16 %v243
    %v1403 = vunpack.c.l.b16 %v244
    %v1404 = vunpack.c.l.b16 %v245
    %v1405 = vunpack.c.l.b16 %v246
    %v1406 = vunpack.c.l.b16 %v247
    %v1407 = vunpack.c.l.b16 %v248
    %v1408 = vunpack.c.l.b16 %v249
    %v1409 = vunpack.c.l.b16 %v250
    %v1410 = vunpack.c.l.b16 %v251
    %v1411 = vunpack.c.l.b16 %v252
    %v1412 = vunpack.c.l.b16 %v253
    %v1413 = vunpack.c.l.b16 %v254
    %v1414 = vunpack.c.l.b16 %v255
    %v1415 = vunpack.c.l.b16 %v256
    %v1416 = vunpack.c.l.b16 %v257
    %v1417 = vunpack.c.l.b16 %v258
    %v1418 = vunpack.c.l.b16 %v259
    %v1419 = vunpack.c.l.b16 %v260
    %v1420 = vunpack.c.l.b16 %v261
    %v1421 = vunpack.c.l.b16 %v262
    %v1422 = vunpack.c.l.b16 %v263
    %v1423 = vunpack.c.l.b16 %v264
    %v1424 = vunpack.c.l.b16 %v265
    %v1425 = vunpack.c.l.b16 %v266
    %v1426 = vunpack.c.l.b16 %v267
    %v1427 = vunpack.c.l.b16 %v268
    %v1428 = vunpack.c.l.b16 %v269
    %v1429 = vunpack.c.l.b16 %v270
    %v1430 = vunpack.c.l.b16 %v271
    %v1431 = vunpack.c.l.b16 %v272
    %v1432 = vunpack.c.l.b16 %v273
    %v1433 = vunpack.c.l.b16 %v274
    %v1434 = vunpack.c.l.b16 %v275
    %v1435 = vunpack.c.l.b16 %v276
    %v1436 = vunpack.c.l.b16 %v277
    %v1437 = vunpack.c.l.b16 %v278
    %v1438 = vunpack.c.l.b16 %v279
    %v1439 = vunpack.c.l.b16 %v280
    %v1440 = vunpack.c.l.b16 %v281
    %v1441 = vunpack.c.l.b16 %v282
    %v1442 = vunpack.c.l.b16 %v283
    %v1443 = vunpack.c.l.b16 %v284
    %v1444 = vunpack.c.l.b16 %v285
    %v1445 = vunpack.c.l.b16 %v286
    %v1446 = vunpack.c.l.b16 %v287
    %v1447 = vunpack.c.l.b16 %v288
    %v1448 = vunpack.c.l.b16 %v289
    %v1449 = vunpack.c.l.b16 %v290
    %v1450 = vunpack.c.l.b16 %v291
    %v1451 = vunpack.c.l.b16 %v292
    %v1452 = vunpack.c.l.b16 %v293
    %v1453 = vunpack.c.l.b16 %v294
    %v1454 = vunpack.c.l.b16 %v295
    %v1455 = vunpack.c.l.b16 %v296
    %v1456 = vunpack.c.l.b16 %v297
    %v1457 = vunpack.c.l.b16 %v298
    %v1458 = vunpack.c.l.b16 %v299
    %v1459 = vunpack.c.l.b16 %v300
    %v1460 = vunpack.c.l.b16 %v301
    %v1461 = vunpack.c.l.b16 %v302
    %v1462 = vunpack.c.l.b16 %v303
    %v1463 = vunpack.c.l.b16 %v304
    %v1464 = vunpack.c.l.b16 %v305
    %v1465 = vunpack.c.l.b16 %v306
    %v1466 = vunpack.c.l.b16 %v307
    %v1467 = vunpack.c.l.b16 %v308
    %v1468 = vunpack.c.l.b16 %v309
    %v1469 = vunpack.c.l.b16 %v310
    %v1470 = vunpack.c.l.b16 %v311
    %v1471 = vunpack.c.l.b16 %v312
    %v1472 = vunpack.c.l.b16 %v313
    %v1473 = vunpack.c.l.b16 %v314
    %v1474 = vunpack.c.l.b16 %v315
    %v1475 = vunpack.c.l.b16 %v316
    %v1476 = vunpack.c.l.b16 %v317
    %v1477 = vunpack.c.l.b16 %v318
    %v1478 = vunpack.c.l.b16 %v319
    %v1479 = vunpack.c.l.b16 %v320
    %v1480 = vunpack.c.l.b16 %v321
    %v1481 = vunpack.c.l.b16 %v322
    %v1482 = vunpack.c.l.b16 %v323
    %v1483 = vunpack.c.l.b16 %v324
    %v1484 = vunpack.c.l.b16 %v325
    %v1485 = vunpack.c.l.b16 %v326
    %v1486 = vunpack.c.l.b16 %v327
    %v1487 = vunpack.c.l.b16 %v328
    %v1488 = vunpack.c.l.b16 %v329
    %v1489 = vunpack.c.l.b16 %v330
    %v1490 = vunpack.c.l.b16 %v331
    %v1491 = vunpack.c.l.b16 %v332
    %v1492 = vunpack.c.l.b16 %v333
    %v1493 = vunpack.c.l.b16 %v334
    %v1494 = vunpack.c.l.b16 %v335
    %v1495 = vunpack.c.l.b16 %v336
    %v1496 = vunpack.c.l.b16 %v337
    %v1497 = vunpack.c.l.b16 %v338
    %v1498 = vunpack.c.l.b16 %v339
    %v1499 = vunpack.c.l.b16 %v340
    %v1500 = vunpack.c.l.b16 %v341
    %v1501 = vunpack.c.l.b16 %v342
    %v1502 = vunpack.c.l.b16 %v343
    %v1503 = vunpack.c.l.b16 %v344
    %v1504 = vunpack.c.l.b16 %v345
    %v1505 = vunpack.c.l.b16 %v346
    %v1506 = vunpack.c.l.b16 %v347
    %v1507 = vunpack.c.l.b16 %v348
    %v1508 = vunpack.c.l.b16 %v349
    %v1509 = vunpack.c.l.b16 %v350
    %v1510 = vunpack.c.l.b16 %v351
    %v1511 = vunpack.c.l.b16 %v352
    %v1512 = vunpack.c.l.b16 %v353
    %v1513 = vunpack.c.l.b16 %v354
    %v1514 = vunpack.c.l.b16 %v355
    %v1515 = vunpack.c.l.b16 %v356
    %v1516 = vunpack.c.l.b16 %v357
    %v1517 = vunpack.c.l.b16 %v358
    %v1518 = vunpack.c.l.b16 %v359
    %v1519 = vunpack.c.l.b16 %v360
    %v1520 = vunpack.c.l.b16 %v361
    %v1521 = vunpack.c.l.b16 %v362
    %v1522 = vunpack.c.l.b16 %v363
    %v1523 = vunpack.c.l.b16 %v364
    %v1524 = vunpack.c.l.b16 %v365
    %v1525 = vunpack.c.l.b16 %v366
    %v1526 = vunpack.c.l.b16 %v367
    %v1527 = vunpack.c.l.b16 %v368
    %v1528 = vunpack.c.l.b16 %v369
    %v1529 = vunpack.c.l.b16 %v370
    %v1530 = vunpack.c.l.b16 %v371
    %v1531 = vunpack.c.l.b16 %v372
    %v1532 = vunpack.c.l.b16 %v373
    %v1533 = vunpack.c.l.b16 %v374
    %v1534 = vunpack.c.l.b16 %v375
    %v1535 = vunpack.c.l.b16 %v376
    %v1536 = vunpack.c.l.b16 %v377
    %v1537 = vunpack.c.l.b16 %v378
    %v1538 = vunpack.c.l.b16 %v379
    %v1539 = vunpack.c.l.b16 %v380
    %v1540 = vunpack.c.l.b16 %v381
    %v1541 = vunpack.c.l.b16 %v382
    %v1542 = vunpack.c.l.b16 %v383
    %v1543 = vunpack.c.l.b16 %v384
    %v1544 = vunpack.c.l.b16 %v385
    %v1545 = vunpack.c.l.b16 %v386
    %v1546 = vunpack.c.l.b16 %v387
    %v1547 = vunpack.c.l.b16 %v388
    %v1548 = vunpack.c.l.b16 %v389
    %v1549 = vunpack.c.l.b16 %v390
    %v1550 = vunpack.c.l.b16 %v391
    %v1551 = vunpack.c.l.b16 %v392
    %v1552 = vunpack.c.l.b16 %v393
    %v1553 = vunpack.c.l.b16 %v394
    %v1554 = vunpack.c.l.b16 %v395
    %v1555 = vunpack.c.l.b16 %v396
    %v1556 = vunpack.c.l.b16 %v397
    %v1557 = vunpack.c.l.b16 %v398
    %v1558 = vunpack.c.l.b16 %v399
    %v1559 = vunpack.c.l.b16 %v400
    %v1560 = vunpack.c.l.b16 %v401
    %v1561 = vunpack.c.l.b16 %v402
    %v1562 = vunpack.c.l.b16 %v403
    %v1563 = vunpack.c.l.b16 %v404
    %v1564 = vunpack.c.l.b16 %v405
    %v1565 = vunpack.c.l.b16 %v406
    %v1566 = vunpack.c.l.b16 %v407
    %v1567 = vunpack.c.l.b16 %v408
    %v1568 = vunpack.c.l.b16 %v409
    %v1569 = vunpack.c.l.b16 %v410
    %v1570 = vunpack.c.l.b16 %v411
    %v1571 = vunpack.c.l.b16 %v412
    %v1572 = vunpack.c.l.b16 %v413
    %v1573 = vunpack.c.l.b16 %v414
    %v1574 = vunpack.c.l.b16 %v415
    %v1575 = vunpack.c.l.b16 %v416
    %v1576 = vunpack.c.l.b16 %v417
    %v1577 = vunpack.c.l.b16 %v418
    %v1578 = vunpack.c.l.b16 %v419
    %v1579 = vunpack.c.l.b16 %v420
    %v1580 = vunpack.c.l.b16 %v421
    %v1581 = vunpack.c.l.b16 %v422
    %v1582 = vunpack.c.l.b16 %v423
    %v1583 = vunpack.c.l.b16 %v424
    %v1584 = vunpack.c.l.b16 %v425
    %v1585 = vunpack.c.l.b16 %v426
    %v1586 = vunpack.c.l.b16 %v427
    %v1587 = vunpack.c.l.b16 %v428
    %v1588 = vunpack.c.l.b16 %v429
    %v1589 = vunpack.c.l.b16 %v430
    %v1590 = vunpack.c.l.b16 %v431
    %v1591 = vunpack.c.l.b16 %v432
    %v1592 = vunpack.c.l.b16 %v433
    %v1593 = vunpack.c.l.b16 %v434
    %v1594 = vunpack.c.l.b16 %v435
    %v1595 = vunpack.c.l.b16 %v436
    %v1596 = vunpack.c.l.b16 %v437
    %v1597 = vunpack.c.l.b16 %v438
    %v1598 = vunpack.c.l.b16 %v439
    %v1599 = vunpack.c.l.b16 %v440
    %v1600 = vunpack.c.l.b16 %v441
    %v1601 = vunpack.c.l.b16 %v442
    %v1602 = vunpack.c.l.b16 %v443
    %v1603 = vpack.c.b16 %v1348, %v1347
    %v1604 = vpack.c.b16 %v1350, %v1349
    %v1605 = vpack.c.b16 %v1352, %v1351
    %v1606 = vpack.c.b16 %v1354, %v1353
    %v1607 = vpack.c.b16 %v1356, %v1355
    %v1608 = vpack.c.b16 %v1358, %v1357
    %v1609 = vpack.c.b16 %v1360, %v1359
    %v1610 = vpack.c.b16 %v1362, %v1361
    %v1611 = vpack.c.b16 %v1364, %v1363
    %v1612 = vpack.c.b16 %v1366, %v1365
    %v1613 = vpack.c.b16 %v1368, %v1367
    %v1614 = vpack.c.b16 %v1370, %v1369
    %v1615 = vpack.c.b16 %v1372, %v1371
    %v1616 = vpack.c.b16 %v1374, %v1373
    %v1617 = vpack.c.b16 %v1376, %v1375
    %v1618 = vpack.c.b16 %v1378, %v1377
    %v1619 = vpack.c.b16 %v1380, %v1379
    %v1620 = vpack.c.b16 %v1382, %v1381
    %v1621 = vpack.c.b16 %v1384, %v1383
    %v1622 = vpack.c.b16 %v1386, %v1385
    %v1623 = vpack.c.b16 %v1388, %v1387
    %v1624 = vpack.c.b16 %v1390, %v1389
    %v1625 = vpack.c.b16 %v1392, %v1391
    %v1626 = vpack.c.b16 %v1394, %v1393
    %v1627 = vpack.c.b16 %v1396, %v1395
    %v1628 = vpack.c.b16 %v1398, %v1397
    %v1629 = vpack.c.b16 %v1400, %v1399
    %v1630 = vpack.c.b16 %v1402, %v1401
    %v1631 = vpack.c.b16 %v1404, %v1403
    %v1632 = vpack.c.b16 %v1406, %v1405
    %v1633 = vpack.c.b16 %v1408, %v1407
    %v1634 = vpack.c.b16 %v1410, %v1409
    %v1635 = vpack.c.b16 %v1412, %v1411
    %v1636 = vpack.c.b16 %v1414, %v1413
    %v1637 = vpack.c.b16 %v1416, %v1415
    %v1638 = vpack.c.b16 %v1418, %v1417
    %v1639 = vpack.c.b16 %v1420, %v1419
    %v1640 = vpack.c.b16 %v1422, %v1421
    %v1641 = vpack.c.b16 %v1424, %v1423
    %v1642 = vpack.c.b16 %v1426, %v1425
    %v1643 = vpack.c.b16 %v1428, %v1427
    %v1644 = vpack.c.b16 %v1430, %v1429
    %v1645 = vpack.c.b16 %v1432, %v1431
    %v1646 = vpack.c.b16 %v1434, %v1433
    %v1647 = vpack.c.b16 %v1436, %v1435
    %v1648 = vpack.c.b16 %v1438, %v1437
    %v1649 = vpack.c.b16 %v1440, %v1439
    %v1650 = vpack.c.b16 %v1442, %v1441
    %v1651 = vpack.c.b16 %v1444, %v1443
    %v1652 = vpack.c.b16 %v1446, %v1445
    %v1653 = vpack.c.b16 %v1448, %v1447
    %v1654 = vpack.c.b16 %v1450, %v1449
    %v1655 = vpack.c.b16 %v1452, %v1451
    %v1656 = vpack.c.b16 %v1454, %v1453
    %v1657 = vpack.c.b16 %v1456, %v1455
    %v1658 = vpack.c.b16 %v1458, %v1457
    %v1659 = vpack.c.b16 %v1460, %v1459
    %v1660 = vpack.c.b16 %v1462, %v1461
    %v1661 = vpack.c.b16 %v1464, %v1463
    %v1662 = vpack.c.b16 %v1466, %v1465
    %v1663 = vpack.c.b16 %v1468, %v1467
    %v1664 = vpack.c.b16 %v1470, %v1469
    %v1665 = vpack.c.b16 %v1472, %v1471
    %v1666 = vpack.c.b16 %v1474, %v1473
    %v1667 = vpack.c.b16 %v1476, %v1475
    %v1668 = vpack.c.b16 %v1478, %v1477
    %v1669 = vpack.c.b16 %v1480, %v1479
    %v1670 = vpack.c.b16 %v1482, %v1481
    %v1671 = vpack.c.b16 %v1484, %v1483
    %v1672 = vpack.c.b16 %v1486, %v1485
    %v1673 = vpack.c.b16 %v1488, %v1487
    %v1674 = vpack.c.b16 %v1490, %v1489
    %v1675 = vpack.c.b16 %v1492, %v1491
    %v1676 = vpack.c.b16 %v1494, %v1493
    %v1677 = vpack.c.b16 %v1496, %v1495
    %v1678 = vpack.c.b16 %v1498, %v1497
    %v1679 = vpack.c.b16 %v1500, %v1499
    %v1680 = vpack.c.b16 %v1502, %v1501
    %v1681 = vpack.c.b16 %v1504, %v1503
    %v1682 = vpack.c.b16 %v1506, %v1505
    %v1683 = vpack.c.b16 %v1508, %v1507
    %v1684 = vpack.c.b16 %v1510, %v1509
    %v1685 = vpack.c.b16 %v1512, %v1511
    %v1686 = vpack.c.b16 %v1514, %v1513
    %v1687 = vpack.c.b16 %v1516, %v1515
    %v1688 = vpack.c.b16 %v1518, %v1517
    %v1689 = vpack.c.b16 %v1520, %v1519
    %v1690 = vpack.c.b16 %v1522, %v1521
    %v1691 = vpack.c.b16 %v1524, %v1523
    %v1692 = vpack.c.b16 %v1526, %v1525
    %v1693 = vpack.c.b16 %v1528, %v1527
    %v1694 = vpack.c.b16 %v1530, %v1529
    %v1695 = vpack.c.b16 %v1532, %v1531
    %v1696 = vpack.c.b16 %v1534, %v1533
    %v1697 = vpack.c.b16 %v1536, %v1535
    %v1698 = vpack.c.b16 %v1538, %v1537
    %v1699 = vpack.c.b16 %v1540, %v1539
    %v1700 = vpack.c.b16 %v1542, %v1541
    %v1701 = vpack.c.b16 %v1544, %v1543
    %v1702 = vpack.c.b16 %v1546, %v1545
    %v1703 = vpack.c.b16 %v1548, %v1547
    %v1704 = vpack.c.b16 %v1550, %v1549
    %v1705 = vpack.c.b16 %v1552, %v1551
    %v1706 = vpack.c.b16 %v1554, %v1553
    %v1707 = vpack.c.b16 %v1556, %v1555
    %v1708 = vpack.c.b16 %v1558, %v1557
    %v1709 = vpack.c.b16 %v1560, %v1559
    %v1710 = vpack.c.b16 %v1562, %v1561
    %v1711 = vpack.c.b16 %v1564, %v1563
    %v1712 = vpack.c.b16 %v1566, %v1565
    %v1713 = vpack.c.b16 %v1568, %v1567
    %v1714 = vpack.c.b16 %v1570, %v1569
    %v1715 = vpack.c.b16 %v1572, %v1571
    %v1716 = vpack.c.b16 %v1574, %v1573
    %v1717 = vpack.c.b16 %v1576, %v1575
    %v1718 = vpack.c.b16 %v1578, %v1577
    %v1719 = vpack.c.b16 %v1580, %v1579
    %v1720 = vpack.c.b16 %v1582, %v1581
    %v1721 = vpack.c.b16 %v1584, %v1583
    %v1722 = vpack.c.b16 %v1586, %v1585
    %v1723 = vpack.c.b16 %v1588, %v1587
    %v1724 = vpack.c.b16 %v1590, %v1589
    %v1725 = vpack.c.b16 %v1592, %v1591
    %v1726 = vpack.c.b16 %v1594, %v1593
    %v1727 = vpack.c.b16 %v1596, %v1595
    %v1728 = vpack.c.b16 %v1598, %v1597
    %v1729 = vpack.c.b16 %v1600, %v1599
    %v1730 = vpack.c.b16 %v1602, %v1601
    %1859 = vmatprep.subr.bf16.mxu0 0
    %1860 = vmatpush1.bf16.msra.mxu0 %v1610
    %1861 = vmatprep.subr.bf16.mxu0 0
    %1862 = vmatpush1.bf16.msra.mxu0 %v1609
    %1863 = vmatprep.subr.bf16.mxu0 0
    %1864 = vmatpush1.bf16.msra.mxu0 %v1608
    %1865 = vmatprep.subr.bf16.mxu0 0
    %1866 = vmatpush1.bf16.msra.mxu0 %v1607
    %1867 = vmatprep.subr.bf16.mxu0 0
    %1868 = vmatpush1.bf16.msra.mxu0 %v1606
    %1869 = vmatprep.subr.bf16.mxu0 0
    %1870 = vmatpush1.bf16.msra.mxu0 %v1605
    %1871 = vmatprep.subr.bf16.mxu0 0
    %1872 = vmatpush1.bf16.msra.mxu0 %v1604
    %1873 = vmatprep.subr.bf16.mxu0 0
    %1874 = vmatpush1.bf16.msra.mxu0 %v1603
    %1875 = vmatprep.subr.bf16.mxu0 0
    %1876 = vmatpush2.bf16.msra.mxu0 %v1618
    %1877 = vmatprep.subr.bf16.mxu0 0
    %1878 = vmatpush2.bf16.msra.mxu0 %v1617
    %1879 = vmatprep.subr.bf16.mxu0 0
    %1880 = vmatpush2.bf16.msra.mxu0 %v1616
    %1881 = vmatprep.subr.bf16.mxu0 0
    %1882 = vmatpush2.bf16.msra.mxu0 %v1615
    %1883 = vmatprep.subr.bf16.mxu0 0
    %1884 = vmatpush2.bf16.msra.mxu0 %v1614
    %1885 = vmatprep.subr.bf16.mxu0 0
    %1886 = vmatpush2.bf16.msra.mxu0 %v1613
    %1887 = vmatprep.subr.bf16.mxu0 0
    %1888 = vmatpush2.bf16.msra.mxu0 %v1612
    %1889 = vmatprep.subr.bf16.mxu0 0
    %1890 = vmatpush2.bf16.msra.mxu0 %v1611
    %1891 = vmatprep.mubr.bf16.mxu0 %v836
    %1892 = vmatmul.mubr.bf16.gmra.mxu0 %v835
    %v1893 = vpop.f32.mrf.mxu0
    %v1894 = vadd.f32 %v449, %v1893
    %v1895 = vpop.f32.mrf.mxu0
    %v1896 = vpop.f32.mrf.mxu0
    %v1897 = vadd.f32 %v449, %v1896
    %v1898 = vpop.f32.mrf.mxu0
    %1899 = vmatprep.mubr.bf16.mxu0 %v852
    %1900 = vmatmul.mubr.bf16.gmra.mxu0 %v851
    %v1901 = vpop.f32.mrf.mxu0
    %v1902 = vadd.f32 %v449, %v1901
    %v1903 = vpop.f32.mrf.mxu0
    %v1904 = vpop.f32.mrf.mxu0
    %v1905 = vadd.f32 %v449, %v1904
    %v1906 = vpop.f32.mrf.mxu0
    %1907 = vmatprep.mubr.bf16.mxu0 %v868
    %1908 = vmatmul.mubr.bf16.gmra.mxu0 %v867
    %v1909 = vpop.f32.mrf.mxu0
    %v1910 = vadd.f32 %v449, %v1909
    %v1911 = vpop.f32.mrf.mxu0
    %v1912 = vpop.f32.mrf.mxu0
    %v1913 = vadd.f32 %v449, %v1912
    %v1914 = vpop.f32.mrf.mxu0
    %1915 = vmatprep.mubr.bf16.mxu0 %v884
    %1916 = vmatmul.mubr.bf16.gmra.mxu0 %v883
    %v1917 = vpop.f32.mrf.mxu0
    %v1918 = vadd.f32 %v449, %v1917
    %v1919 = vpop.f32.mrf.mxu0
    %v1920 = vpop.f32.mrf.mxu0
    %v1921 = vadd.f32 %v449, %v1920
    %v1922 = vpop.f32.mrf.mxu0
    %1923 = vmatprep.mubr.bf16.mxu0 %v900
    %1924 = vmatmul.mubr.bf16.gmra.mxu0 %v899
    %v1925 = vpop.f32.mrf.mxu0
    %v1926 = vadd.f32 %v449, %v1925
    %v1927 = vpop.f32.mrf.mxu0
    %v1928 = vpop.f32.mrf.mxu0
    %v1929 = vadd.f32 %v449, %v1928
    %v1930 = vpop.f32.mrf.mxu0
    %1931 = vmatprep.mubr.bf16.mxu0 %v916
    %1932 = vmatmul.mubr.bf16.gmra.mxu0 %v915
    %v1933 = vpop.f32.mrf.mxu0
    %v1934 = vadd.f32 %v449, %v1933
    %v1935 = vpop.f32.mrf.mxu0
    %v1936 = vpop.f32.mrf.mxu0
    %v1937 = vadd.f32 %v449, %v1936
    %v1938 = vpop.f32.mrf.mxu0
    %1939 = vmatprep.mubr.bf16.mxu0 %v932
    %1940 = vmatmul.mubr.bf16.gmra.mxu0 %v931
    %v1941 = vpop.f32.mrf.mxu0
    %v1942 = vadd.f32 %v449, %v1941
    %v1943 = vpop.f32.mrf.mxu0
    %v1944 = vpop.f32.mrf.mxu0
    %v1945 = vadd.f32 %v449, %v1944
    %v1946 = vpop.f32.mrf.mxu0
    %1947 = vmatprep.mubr.bf16.mxu0 %v948
    %1948 = vmatmul.mubr.bf16.gmra.mxu0 %v947
    %v1949 = vpop.f32.mrf.mxu0
    %v1950 = vadd.f32 %v449, %v1949
    %v1951 = vpop.f32.mrf.mxu0
    %v1952 = vpop.f32.mrf.mxu0
    %v1953 = vadd.f32 %v449, %v1952
    %v1954 = vpop.f32.mrf.mxu0
    %1955 = vdwg.mxu0
    %1956 = vmatprep.subr.bf16.mxu0 0
    %1957 = vmatpush1.bf16.msra.mxu0 %v1626
    %1958 = vmatprep.subr.bf16.mxu0 0
    %1959 = vmatpush1.bf16.msra.mxu0 %v1625
    %1960 = vmatprep.subr.bf16.mxu0 0
    %1961 = vmatpush1.bf16.msra.mxu0 %v1624
    %1962 = vmatprep.subr.bf16.mxu0 0
    %1963 = vmatpush1.bf16.msra.mxu0 %v1623
    %1964 = vmatprep.subr.bf16.mxu0 0
    %1965 = vmatpush1.bf16.msra.mxu0 %v1622
    %1966 = vmatprep.subr.bf16.mxu0 0
    %1967 = vmatpush1.bf16.msra.mxu0 %v1621
    %1968 = vmatprep.subr.bf16.mxu0 0
    %1969 = vmatpush1.bf16.msra.mxu0 %v1620
    %1970 = vmatprep.subr.bf16.mxu0 0
    %1971 = vmatpush1.bf16.msra.mxu0 %v1619
    %1972 = vmatprep.subr.bf16.mxu0 0
    %1973 = vmatpush2.bf16.msra.mxu0 %v1634
    %1974 = vmatprep.subr.bf16.mxu0 0
    %1975 = vmatpush2.bf16.msra.mxu0 %v1633
    %1976 = vmatprep.subr.bf16.mxu0 0
    %1977 = vmatpush2.bf16.msra.mxu0 %v1632
    %1978 = vmatprep.subr.bf16.mxu0 0
    %1979 = vmatpush2.bf16.msra.mxu0 %v1631
    %1980 = vmatprep.subr.bf16.mxu0 0
    %1981 = vmatpush2.bf16.msra.mxu0 %v1630
    %1982 = vmatprep.subr.bf16.mxu0 0
    %1983 = vmatpush2.bf16.msra.mxu0 %v1629
    %1984 = vmatprep.subr.bf16.mxu0 0
    %1985 = vmatpush2.bf16.msra.mxu0 %v1628
    %1986 = vmatprep.subr.bf16.mxu0 0
    %1987 = vmatpush2.bf16.msra.mxu0 %v1627
    %1988 = vmatprep.mubr.bf16.mxu0 %v838
    %1989 = vmatmul.mubr.bf16.gmra.mxu0 %v837
    %v1990 = vpop.f32.mrf.mxu0
    %v1991 = vadd.f32 %v1894, %v1990
    %v1992 = vpop.f32.mrf.mxu0
    %v1993 = vpop.f32.mrf.mxu0
    %v1994 = vadd.f32 %v1897, %v1993
    %v1995 = vpop.f32.mrf.mxu0
    %1996 = vmatprep.mubr.bf16.mxu0 %v854
    %1997 = vmatmul.mubr.bf16.gmra.mxu0 %v853
    %v1998 = vpop.f32.mrf.mxu0
    %v1999 = vadd.f32 %v1902, %v1998
    %v2000 = vpop.f32.mrf.mxu0
    %v2001 = vpop.f32.mrf.mxu0
    %v2002 = vadd.f32 %v1905, %v2001
    %v2003 = vpop.f32.mrf.mxu0
    %2004 = vmatprep.mubr.bf16.mxu0 %v870
    %2005 = vmatmul.mubr.bf16.gmra.mxu0 %v869
    %v2006 = vpop.f32.mrf.mxu0
    %v2007 = vadd.f32 %v1910, %v2006
    %v2008 = vpop.f32.mrf.mxu0
    %v2009 = vpop.f32.mrf.mxu0
    %v2010 = vadd.f32 %v1913, %v2009
    %v2011 = vpop.f32.mrf.mxu0
    %2012 = vmatprep.mubr.bf16.mxu0 %v886
    %2013 = vmatmul.mubr.bf16.gmra.mxu0 %v885
    %v2014 = vpop.f32.mrf.mxu0
    %v2015 = vadd.f32 %v1918, %v2014
    %v2016 = vpop.f32.mrf.mxu0
    %v2017 = vpop.f32.mrf.mxu0
    %v2018 = vadd.f32 %v1921, %v2017
    %v2019 = vpop.f32.mrf.mxu0
    %2020 = vmatprep.mubr.bf16.mxu0 %v902
    %2021 = vmatmul.mubr.bf16.gmra.mxu0 %v901
    %v2022 = vpop.f32.mrf.mxu0
    %v2023 = vadd.f32 %v1926, %v2022
    %v2024 = vpop.f32.mrf.mxu0
    %v2025 = vpop.f32.mrf.mxu0
    %v2026 = vadd.f32 %v1929, %v2025
    %v2027 = vpop.f32.mrf.mxu0
    %2028 = vmatprep.mubr.bf16.mxu0 %v918
    %2029 = vmatmul.mubr.bf16.gmra.mxu0 %v917
    %v2030 = vpop.f32.mrf.mxu0
    %v2031 = vadd.f32 %v1934, %v2030
    %v2032 = vpop.f32.mrf.mxu0
    %v2033 = vpop.f32.mrf.mxu0
    %v2034 = vadd.f32 %v1937, %v2033
    %v2035 = vpop.f32.mrf.mxu0
    %2036 = vmatprep.mubr.bf16.mxu0 %v934
    %2037 = vmatmul.mubr.bf16.gmra.mxu0 %v933
    %v2038 = vpop.f32.mrf.mxu0
    %v2039 = vadd.f32 %v1942, %v2038
    %v2040 = vpop.f32.mrf.mxu0
    %v2041 = vpop.f32.mrf.mxu0
    %v2042 = vadd.f32 %v1945, %v2041
    %v2043 = vpop.f32.mrf.mxu0
    %2044 = vmatprep.mubr.bf16.mxu0 %v950
    %2045 = vmatmul.mubr.bf16.gmra.mxu0 %v949
    %v2046 = vpop.f32.mrf.mxu0
    %v2047 = vadd.f32 %v1950, %v2046
    %v2048 = vpop.f32.mrf.mxu0
    %v2049 = vpop.f32.mrf.mxu0
    %v2050 = vadd.f32 %v1953, %v2049
    %v2051 = vpop.f32.mrf.mxu0
    %2052 = vdwg.mxu0
    %2053 = vmatprep.subr.bf16.mxu0 0
    %2054 = vmatpush1.bf16.msra.mxu0 %v1642
    %2055 = vmatprep.subr.bf16.mxu0 0
    %2056 = vmatpush1.bf16.msra.mxu0 %v1641
    %2057 = vmatprep.subr.bf16.mxu0 0
    %2058 = vmatpush1.bf16.msra.mxu0 %v1640
    %2059 = vmatprep.subr.bf16.mxu0 0
    %2060 = vmatpush1.bf16.msra.mxu0 %v1639
    %2061 = vmatprep.subr.bf16.mxu0 0
    %2062 = vmatpush1.bf16.msra.mxu0 %v1638
    %2063 = vmatprep.subr.bf16.mxu0 0
    %2064 = vmatpush1.bf16.msra.mxu0 %v1637
    %2065 = vmatprep.subr.bf16.mxu0 0
    %2066 = vmatpush1.bf16.msra.mxu0 %v1636
    %2067 = vmatprep.subr.bf16.mxu0 0
    %2068 = vmatpush1.bf16.msra.mxu0 %v1635
    %2069 = vmatprep.subr.bf16.mxu0 0
    %2070 = vmatpush2.bf16.msra.mxu0 %v1650
    %2071 = vmatprep.subr.bf16.mxu0 0
    %2072 = vmatpush2.bf16.msra.mxu0 %v1649
    %2073 = vmatprep.subr.bf16.mxu0 0
    %2074 = vmatpush2.bf16.msra.mxu0 %v1648
    %2075 = vmatprep.subr.bf16.mxu0 0
    %2076 = vmatpush2.bf16.msra.mxu0 %v1647
    %2077 = vmatprep.subr.bf16.mxu0 0
    %2078 = vmatpush2.bf16.msra.mxu0 %v1646
    %2079 = vmatprep.subr.bf16.mxu0 0
    %2080 = vmatpush2.bf16.msra.mxu0 %v1645
    %2081 = vmatprep.subr.bf16.mxu0 0
    %2082 = vmatpush2.bf16.msra.mxu0 %v1644
    %2083 = vmatprep.subr.bf16.mxu0 0
    %2084 = vmatpush2.bf16.msra.mxu0 %v1643
    %2085 = vmatprep.mubr.bf16.mxu0 %v840
    %2086 = vmatmul.mubr.bf16.gmra.mxu0 %v839
    %v2087 = vpop.f32.mrf.mxu0
    %v2088 = vadd.f32 %v1991, %v2087
    %v2089 = vpop.f32.mrf.mxu0
    %v2090 = vpop.f32.mrf.mxu0
    %v2091 = vadd.f32 %v1994, %v2090
    %v2092 = vpop.f32.mrf.mxu0
    %2093 = vmatprep.mubr.bf16.mxu0 %v856
    %2094 = vmatmul.mubr.bf16.gmra.mxu0 %v855
    %v2095 = vpop.f32.mrf.mxu0
    %v2096 = vadd.f32 %v1999, %v2095
    %v2097 = vpop.f32.mrf.mxu0
    %v2098 = vpop.f32.mrf.mxu0
    %v2099 = vadd.f32 %v2002, %v2098
    %v2100 = vpop.f32.mrf.mxu0
    %2101 = vmatprep.mubr.bf16.mxu0 %v872
    %2102 = vmatmul.mubr.bf16.gmra.mxu0 %v871
    %v2103 = vpop.f32.mrf.mxu0
    %v2104 = vadd.f32 %v2007, %v2103
    %v2105 = vpop.f32.mrf.mxu0
    %v2106 = vpop.f32.mrf.mxu0
    %v2107 = vadd.f32 %v2010, %v2106
    %v2108 = vpop.f32.mrf.mxu0
    %2109 = vmatprep.mubr.bf16.mxu0 %v888
    %2110 = vmatmul.mubr.bf16.gmra.mxu0 %v887
    %v2111 = vpop.f32.mrf.mxu0
    %v2112 = vadd.f32 %v2015, %v2111
    %v2113 = vpop.f32.mrf.mxu0
    %v2114 = vpop.f32.mrf.mxu0
    %v2115 = vadd.f32 %v2018, %v2114
    %v2116 = vpop.f32.mrf.mxu0
    %2117 = vmatprep.mubr.bf16.mxu0 %v904
    %2118 = vmatmul.mubr.bf16.gmra.mxu0 %v903
    %v2119 = vpop.f32.mrf.mxu0
    %v2120 = vadd.f32 %v2023, %v2119
    %v2121 = vpop.f32.mrf.mxu0
    %v2122 = vpop.f32.mrf.mxu0
    %v2123 = vadd.f32 %v2026, %v2122
    %v2124 = vpop.f32.mrf.mxu0
    %2125 = vmatprep.mubr.bf16.mxu0 %v920
    %2126 = vmatmul.mubr.bf16.gmra.mxu0 %v919
    %v2127 = vpop.f32.mrf.mxu0
    %v2128 = vadd.f32 %v2031, %v2127
    %v2129 = vpop.f32.mrf.mxu0
    %v2130 = vpop.f32.mrf.mxu0
    %v2131 = vadd.f32 %v2034, %v2130
    %v2132 = vpop.f32.mrf.mxu0
    %2133 = vmatprep.mubr.bf16.mxu0 %v936
    %2134 = vmatmul.mubr.bf16.gmra.mxu0 %v935
    %v2135 = vpop.f32.mrf.mxu0
    %v2136 = vadd.f32 %v2039, %v2135
    %v2137 = vpop.f32.mrf.mxu0
    %v2138 = vpop.f32.mrf.mxu0
    %v2139 = vadd.f32 %v2042, %v2138
    %v2140 = vpop.f32.mrf.mxu0
    %2141 = vmatprep.mubr.bf16.mxu0 %v952
    %2142 = vmatmul.mubr.bf16.gmra.mxu0 %v951
    %v2143 = vpop.f32.mrf.mxu0
    %v2144 = vadd.f32 %v2047, %v2143
    %v2145 = vpop.f32.mrf.mxu0
    %v2146 = vpop.f32.mrf.mxu0
    %v2147 = vadd.f32 %v2050, %v2146
    %v2148 = vpop.f32.mrf.mxu0
    %2149 = vdwg.mxu0
    %2150 = vmatprep.subr.bf16.mxu0 0
    %2151 = vmatpush1.bf16.msra.mxu0 %v1658
    %2152 = vmatprep.subr.bf16.mxu0 0
    %2153 = vmatpush1.bf16.msra.mxu0 %v1657
    %2154 = vmatprep.subr.bf16.mxu0 0
    %2155 = vmatpush1.bf16.msra.mxu0 %v1656
    %2156 = vmatprep.subr.bf16.mxu0 0
    %2157 = vmatpush1.bf16.msra.mxu0 %v1655
    %2158 = vmatprep.subr.bf16.mxu0 0
    %2159 = vmatpush1.bf16.msra.mxu0 %v1654
    %2160 = vmatprep.subr.bf16.mxu0 0
    %2161 = vmatpush1.bf16.msra.mxu0 %v1653
    %2162 = vmatprep.subr.bf16.mxu0 0
    %2163 = vmatpush1.bf16.msra.mxu0 %v1652
    %2164 = vmatprep.subr.bf16.mxu0 0
    %2165 = vmatpush1.bf16.msra.mxu0 %v1651
    %2166 = vmatprep.subr.bf16.mxu0 0
    %2167 = vmatpush2.bf16.msra.mxu0 %v1666
    %2168 = vmatprep.subr.bf16.mxu0 0
    %2169 = vmatpush2.bf16.msra.mxu0 %v1665
    %2170 = vmatprep.subr.bf16.mxu0 0
    %2171 = vmatpush2.bf16.msra.mxu0 %v1664
    %2172 = vmatprep.subr.bf16.mxu0 0
    %2173 = vmatpush2.bf16.msra.mxu0 %v1663
    %2174 = vmatprep.subr.bf16.mxu0 0
    %2175 = vmatpush2.bf16.msra.mxu0 %v1662
    %2176 = vmatprep.subr.bf16.mxu0 0
    %2177 = vmatpush2.bf16.msra.mxu0 %v1661
    %2178 = vmatprep.subr.bf16.mxu0 0
    %2179 = vmatpush2.bf16.msra.mxu0 %v1660
    %2180 = vmatprep.subr.bf16.mxu0 0
    %2181 = vmatpush2.bf16.msra.mxu0 %v1659
    %2182 = vmatprep.mubr.bf16.mxu0 %v842
    %2183 = vmatmul.mubr.bf16.gmra.mxu0 %v841
    %v2184 = vpop.f32.mrf.mxu0
    %v2185 = vadd.f32 %v2088, %v2184
    %v2186 = vpop.f32.mrf.mxu0
    %v2187 = vpop.f32.mrf.mxu0
    %v2188 = vadd.f32 %v2091, %v2187
    %v2189 = vpop.f32.mrf.mxu0
    %2190 = vmatprep.mubr.bf16.mxu0 %v858
    %2191 = vmatmul.mubr.bf16.gmra.mxu0 %v857
    %v2192 = vpop.f32.mrf.mxu0
    %v2193 = vadd.f32 %v2096, %v2192
    %v2194 = vpop.f32.mrf.mxu0
    %v2195 = vpop.f32.mrf.mxu0
    %v2196 = vadd.f32 %v2099, %v2195
    %v2197 = vpop.f32.mrf.mxu0
    %2198 = vmatprep.mubr.bf16.mxu0 %v874
    %2199 = vmatmul.mubr.bf16.gmra.mxu0 %v873
    %v2200 = vpop.f32.mrf.mxu0
    %v2201 = vadd.f32 %v2104, %v2200
    %v2202 = vpop.f32.mrf.mxu0
    %v2203 = vpop.f32.mrf.mxu0
    %v2204 = vadd.f32 %v2107, %v2203
    %v2205 = vpop.f32.mrf.mxu0
    %2206 = vmatprep.mubr.bf16.mxu0 %v890
    %2207 = vmatmul.mubr.bf16.gmra.mxu0 %v889
    %v2208 = vpop.f32.mrf.mxu0
    %v2209 = vadd.f32 %v2112, %v2208
    %v2210 = vpop.f32.mrf.mxu0
    %v2211 = vpop.f32.mrf.mxu0
    %v2212 = vadd.f32 %v2115, %v2211
    %v2213 = vpop.f32.mrf.mxu0
    %2214 = vmatprep.mubr.bf16.mxu0 %v906
    %2215 = vmatmul.mubr.bf16.gmra.mxu0 %v905
    %v2216 = vpop.f32.mrf.mxu0
    %v2217 = vadd.f32 %v2120, %v2216
    %v2218 = vpop.f32.mrf.mxu0
    %v2219 = vpop.f32.mrf.mxu0
    %v2220 = vadd.f32 %v2123, %v2219
    %v2221 = vpop.f32.mrf.mxu0
    %2222 = vmatprep.mubr.bf16.mxu0 %v922
    %2223 = vmatmul.mubr.bf16.gmra.mxu0 %v921
    %v2224 = vpop.f32.mrf.mxu0
    %v2225 = vadd.f32 %v2128, %v2224
    %v2226 = vpop.f32.mrf.mxu0
    %v2227 = vpop.f32.mrf.mxu0
    %v2228 = vadd.f32 %v2131, %v2227
    %v2229 = vpop.f32.mrf.mxu0
    %2230 = vmatprep.mubr.bf16.mxu0 %v938
    %2231 = vmatmul.mubr.bf16.gmra.mxu0 %v937
    %v2232 = vpop.f32.mrf.mxu0
    %v2233 = vadd.f32 %v2136, %v2232
    %v2234 = vpop.f32.mrf.mxu0
    %v2235 = vpop.f32.mrf.mxu0
    %v2236 = vadd.f32 %v2139, %v2235
    %v2237 = vpop.f32.mrf.mxu0
    %2238 = vmatprep.mubr.bf16.mxu0 %v954
    %2239 = vmatmul.mubr.bf16.gmra.mxu0 %v953
    %v2240 = vpop.f32.mrf.mxu0
    %v2241 = vadd.f32 %v2144, %v2240
    %v2242 = vpop.f32.mrf.mxu0
    %v2243 = vpop.f32.mrf.mxu0
    %v2244 = vadd.f32 %v2147, %v2243
    %v2245 = vpop.f32.mrf.mxu0
    %2246 = vdwg.mxu0
    %2247 = vmatprep.subr.bf16.mxu0 0
    %2248 = vmatpush1.bf16.msra.mxu0 %v1674
    %2249 = vmatprep.subr.bf16.mxu0 0
    %2250 = vmatpush1.bf16.msra.mxu0 %v1673
    %2251 = vmatprep.subr.bf16.mxu0 0
    %2252 = vmatpush1.bf16.msra.mxu0 %v1672
    %2253 = vmatprep.subr.bf16.mxu0 0
    %2254 = vmatpush1.bf16.msra.mxu0 %v1671
    %2255 = vmatprep.subr.bf16.mxu0 0
    %2256 = vmatpush1.bf16.msra.mxu0 %v1670
    %2257 = vmatprep.subr.bf16.mxu0 0
    %2258 = vmatpush1.bf16.msra.mxu0 %v1669
    %2259 = vmatprep.subr.bf16.mxu0 0
    %2260 = vmatpush1.bf16.msra.mxu0 %v1668
    %2261 = vmatprep.subr.bf16.mxu0 0
    %2262 = vmatpush1.bf16.msra.mxu0 %v1667
    %2263 = vmatprep.subr.bf16.mxu0 0
    %2264 = vmatpush2.bf16.msra.mxu0 %v1682
    %2265 = vmatprep.subr.bf16.mxu0 0
    %2266 = vmatpush2.bf16.msra.mxu0 %v1681
    %2267 = vmatprep.subr.bf16.mxu0 0
    %2268 = vmatpush2.bf16.msra.mxu0 %v1680
    %2269 = vmatprep.subr.bf16.mxu0 0
    %2270 = vmatpush2.bf16.msra.mxu0 %v1679
    %2271 = vmatprep.subr.bf16.mxu0 0
    %2272 = vmatpush2.bf16.msra.mxu0 %v1678
    %2273 = vmatprep.subr.bf16.mxu0 0
    %2274 = vmatpush2.bf16.msra.mxu0 %v1677
    %2275 = vmatprep.subr.bf16.mxu0 0
    %2276 = vmatpush2.bf16.msra.mxu0 %v1676
    %2277 = vmatprep.subr.bf16.mxu0 0
    %2278 = vmatpush2.bf16.msra.mxu0 %v1675
    %2279 = vmatprep.mubr.bf16.mxu0 %v844
    %2280 = vmatmul.mubr.bf16.gmra.mxu0 %v843
    %v2281 = vpop.f32.mrf.mxu0
    %v2282 = vadd.f32 %v2185, %v2281
    %v2283 = vpop.f32.mrf.mxu0
    %v2284 = vpop.f32.mrf.mxu0
    %v2285 = vadd.f32 %v2188, %v2284
    %v2286 = vpop.f32.mrf.mxu0
    %2287 = vmatprep.mubr.bf16.mxu0 %v860
    %2288 = vmatmul.mubr.bf16.gmra.mxu0 %v859
    %v2289 = vpop.f32.mrf.mxu0
    %v2290 = vadd.f32 %v2193, %v2289
    %v2291 = vpop.f32.mrf.mxu0
    %v2292 = vpop.f32.mrf.mxu0
    %v2293 = vadd.f32 %v2196, %v2292
    %v2294 = vpop.f32.mrf.mxu0
    %2295 = vmatprep.mubr.bf16.mxu0 %v876
    %2296 = vmatmul.mubr.bf16.gmra.mxu0 %v875
    %v2297 = vpop.f32.mrf.mxu0
    %v2298 = vadd.f32 %v2201, %v2297
    %v2299 = vpop.f32.mrf.mxu0
    %v2300 = vpop.f32.mrf.mxu0
    %v2301 = vadd.f32 %v2204, %v2300
    %v2302 = vpop.f32.mrf.mxu0
    %2303 = vmatprep.mubr.bf16.mxu0 %v892
    %2304 = vmatmul.mubr.bf16.gmra.mxu0 %v891
    %v2305 = vpop.f32.mrf.mxu0
    %v2306 = vadd.f32 %v2209, %v2305
    %v2307 = vpop.f32.mrf.mxu0
    %v2308 = vpop.f32.mrf.mxu0
    %v2309 = vadd.f32 %v2212, %v2308
    %v2310 = vpop.f32.mrf.mxu0
    %2311 = vmatprep.mubr.bf16.mxu0 %v908
    %2312 = vmatmul.mubr.bf16.gmra.mxu0 %v907
    %v2313 = vpop.f32.mrf.mxu0
    %v2314 = vadd.f32 %v2217, %v2313
    %v2315 = vpop.f32.mrf.mxu0
    %v2316 = vpop.f32.mrf.mxu0
    %v2317 = vadd.f32 %v2220, %v2316
    %v2318 = vpop.f32.mrf.mxu0
    %2319 = vmatprep.mubr.bf16.mxu0 %v924
    %2320 = vmatmul.mubr.bf16.gmra.mxu0 %v923
    %v2321 = vpop.f32.mrf.mxu0
    %v2322 = vadd.f32 %v2225, %v2321
    %v2323 = vpop.f32.mrf.mxu0
    %v2324 = vpop.f32.mrf.mxu0
    %v2325 = vadd.f32 %v2228, %v2324
    %v2326 = vpop.f32.mrf.mxu0
    %2327 = vmatprep.mubr.bf16.mxu0 %v940
    %2328 = vmatmul.mubr.bf16.gmra.mxu0 %v939
    %v2329 = vpop.f32.mrf.mxu0
    %v2330 = vadd.f32 %v2233, %v2329
    %v2331 = vpop.f32.mrf.mxu0
    %v2332 = vpop.f32.mrf.mxu0
    %v2333 = vadd.f32 %v2236, %v2332
    %v2334 = vpop.f32.mrf.mxu0
    %2335 = vmatprep.mubr.bf16.mxu0 %v956
    %2336 = vmatmul.mubr.bf16.gmra.mxu0 %v955
    %v2337 = vpop.f32.mrf.mxu0
    %v2338 = vadd.f32 %v2241, %v2337
    %v2339 = vpop.f32.mrf.mxu0
    %v2340 = vpop.f32.mrf.mxu0
    %v2341 = vadd.f32 %v2244, %v2340
    %v2342 = vpop.f32.mrf.mxu0
    %2343 = vdwg.mxu0
    %2344 = vmatprep.subr.bf16.mxu0 0
    %2345 = vmatpush1.bf16.msra.mxu0 %v1690
    %2346 = vmatprep.subr.bf16.mxu0 0
    %2347 = vmatpush1.bf16.msra.mxu0 %v1689
    %2348 = vmatprep.subr.bf16.mxu0 0
    %2349 = vmatpush1.bf16.msra.mxu0 %v1688
    %2350 = vmatprep.subr.bf16.mxu0 0
    %2351 = vmatpush1.bf16.msra.mxu0 %v1687
    %2352 = vmatprep.subr.bf16.mxu0 0
    %2353 = vmatpush1.bf16.msra.mxu0 %v1686
    %2354 = vmatprep.subr.bf16.mxu0 0
    %2355 = vmatpush1.bf16.msra.mxu0 %v1685
    %2356 = vmatprep.subr.bf16.mxu0 0
    %2357 = vmatpush1.bf16.msra.mxu0 %v1684
    %2358 = vmatprep.subr.bf16.mxu0 0
    %2359 = vmatpush1.bf16.msra.mxu0 %v1683
    %2360 = vmatprep.subr.bf16.mxu0 0
    %2361 = vmatpush2.bf16.msra.mxu0 %v1698
    %2362 = vmatprep.subr.bf16.mxu0 0
    %2363 = vmatpush2.bf16.msra.mxu0 %v1697
    %2364 = vmatprep.subr.bf16.mxu0 0
    %2365 = vmatpush2.bf16.msra.mxu0 %v1696
    %2366 = vmatprep.subr.bf16.mxu0 0
    %2367 = vmatpush2.bf16.msra.mxu0 %v1695
    %2368 = vmatprep.subr.bf16.mxu0 0
    %2369 = vmatpush2.bf16.msra.mxu0 %v1694
    %2370 = vmatprep.subr.bf16.mxu0 0
    %2371 = vmatpush2.bf16.msra.mxu0 %v1693
    %2372 = vmatprep.subr.bf16.mxu0 0
    %2373 = vmatpush2.bf16.msra.mxu0 %v1692
    %2374 = vmatprep.subr.bf16.mxu0 0
    %2375 = vmatpush2.bf16.msra.mxu0 %v1691
    %2376 = vmatprep.mubr.bf16.mxu0 %v846
    %2377 = vmatmul.mubr.bf16.gmra.mxu0 %v845
    %v2378 = vpop.f32.mrf.mxu0
    %v2379 = vadd.f32 %v2282, %v2378
    %v2380 = vpop.f32.mrf.mxu0
    %v2381 = vpop.f32.mrf.mxu0
    %v2382 = vadd.f32 %v2285, %v2381
    %v2383 = vpop.f32.mrf.mxu0
    %2384 = vmatprep.mubr.bf16.mxu0 %v862
    %2385 = vmatmul.mubr.bf16.gmra.mxu0 %v861
    %v2386 = vpop.f32.mrf.mxu0
    %v2387 = vadd.f32 %v2290, %v2386
    %v2388 = vpop.f32.mrf.mxu0
    %v2389 = vpop.f32.mrf.mxu0
    %v2390 = vadd.f32 %v2293, %v2389
    %v2391 = vpop.f32.mrf.mxu0
    %2392 = vmatprep.mubr.bf16.mxu0 %v878
    %2393 = vmatmul.mubr.bf16.gmra.mxu0 %v877
    %v2394 = vpop.f32.mrf.mxu0
    %v2395 = vadd.f32 %v2298, %v2394
    %v2396 = vpop.f32.mrf.mxu0
    %v2397 = vpop.f32.mrf.mxu0
    %v2398 = vadd.f32 %v2301, %v2397
    %v2399 = vpop.f32.mrf.mxu0
    %2400 = vmatprep.mubr.bf16.mxu0 %v894
    %2401 = vmatmul.mubr.bf16.gmra.mxu0 %v893
    %v2402 = vpop.f32.mrf.mxu0
    %v2403 = vadd.f32 %v2306, %v2402
    %v2404 = vpop.f32.mrf.mxu0
    %v2405 = vpop.f32.mrf.mxu0
    %v2406 = vadd.f32 %v2309, %v2405
    %v2407 = vpop.f32.mrf.mxu0
    %2408 = vmatprep.mubr.bf16.mxu0 %v910
    %2409 = vmatmul.mubr.bf16.gmra.mxu0 %v909
    %v2410 = vpop.f32.mrf.mxu0
    %v2411 = vadd.f32 %v2314, %v2410
    %v2412 = vpop.f32.mrf.mxu0
    %v2413 = vpop.f32.mrf.mxu0
    %v2414 = vadd.f32 %v2317, %v2413
    %v2415 = vpop.f32.mrf.mxu0
    %2416 = vmatprep.mubr.bf16.mxu0 %v926
    %2417 = vmatmul.mubr.bf16.gmra.mxu0 %v925
    %v2418 = vpop.f32.mrf.mxu0
    %v2419 = vadd.f32 %v2322, %v2418
    %v2420 = vpop.f32.mrf.mxu0
    %v2421 = vpop.f32.mrf.mxu0
    %v2422 = vadd.f32 %v2325, %v2421
    %v2423 = vpop.f32.mrf.mxu0
    %2424 = vmatprep.mubr.bf16.mxu0 %v942
    %2425 = vmatmul.mubr.bf16.gmra.mxu0 %v941
    %v2426 = vpop.f32.mrf.mxu0
    %v2427 = vadd.f32 %v2330, %v2426
    %v2428 = vpop.f32.mrf.mxu0
    %v2429 = vpop.f32.mrf.mxu0
    %v2430 = vadd.f32 %v2333, %v2429
    %v2431 = vpop.f32.mrf.mxu0
    %2432 = vmatprep.mubr.bf16.mxu0 %v958
    %2433 = vmatmul.mubr.bf16.gmra.mxu0 %v957
    %v2434 = vpop.f32.mrf.mxu0
    %v2435 = vadd.f32 %v2338, %v2434
    %v2436 = vpop.f32.mrf.mxu0
    %v2437 = vpop.f32.mrf.mxu0
    %v2438 = vadd.f32 %v2341, %v2437
    %v2439 = vpop.f32.mrf.mxu0
    %2440 = vdwg.mxu0
    %2441 = vmatprep.subr.bf16.mxu0 0
    %2442 = vmatpush1.bf16.msra.mxu0 %v1706
    %2443 = vmatprep.subr.bf16.mxu0 0
    %2444 = vmatpush1.bf16.msra.mxu0 %v1705
    %2445 = vmatprep.subr.bf16.mxu0 0
    %2446 = vmatpush1.bf16.msra.mxu0 %v1704
    %2447 = vmatprep.subr.bf16.mxu0 0
    %2448 = vmatpush1.bf16.msra.mxu0 %v1703
    %2449 = vmatprep.subr.bf16.mxu0 0
    %2450 = vmatpush1.bf16.msra.mxu0 %v1702
    %2451 = vmatprep.subr.bf16.mxu0 0
    %2452 = vmatpush1.bf16.msra.mxu0 %v1701
    %2453 = vmatprep.subr.bf16.mxu0 0
    %2454 = vmatpush1.bf16.msra.mxu0 %v1700
    %2455 = vmatprep.subr.bf16.mxu0 0
    %2456 = vmatpush1.bf16.msra.mxu0 %v1699
    %2457 = vmatprep.subr.bf16.mxu0 0
    %2458 = vmatpush2.bf16.msra.mxu0 %v1714
    %2459 = vmatprep.subr.bf16.mxu0 0
    %2460 = vmatpush2.bf16.msra.mxu0 %v1713
    %2461 = vmatprep.subr.bf16.mxu0 0
    %2462 = vmatpush2.bf16.msra.mxu0 %v1712
    %2463 = vmatprep.subr.bf16.mxu0 0
    %2464 = vmatpush2.bf16.msra.mxu0 %v1711
    %2465 = vmatprep.subr.bf16.mxu0 0
    %2466 = vmatpush2.bf16.msra.mxu0 %v1710
    %2467 = vmatprep.subr.bf16.mxu0 0
    %2468 = vmatpush2.bf16.msra.mxu0 %v1709
    %2469 = vmatprep.subr.bf16.mxu0 0
    %2470 = vmatpush2.bf16.msra.mxu0 %v1708
    %2471 = vmatprep.subr.bf16.mxu0 0
    %2472 = vmatpush2.bf16.msra.mxu0 %v1707
    %2473 = vmatprep.mubr.bf16.mxu0 %v848
    %2474 = vmatmul.mubr.bf16.gmra.mxu0 %v847
    %v2475 = vpop.f32.mrf.mxu0
    %v2476 = vadd.f32 %v2379, %v2475
    %v2477 = vpop.f32.mrf.mxu0
    %v2478 = vpop.f32.mrf.mxu0
    %v2479 = vadd.f32 %v2382, %v2478
    %v2480 = vpop.f32.mrf.mxu0
    %2481 = vmatprep.mubr.bf16.mxu0 %v864
    %2482 = vmatmul.mubr.bf16.gmra.mxu0 %v863
    %v2483 = vpop.f32.mrf.mxu0
    %v2484 = vadd.f32 %v2387, %v2483
    %v2485 = vpop.f32.mrf.mxu0
    %v2486 = vpop.f32.mrf.mxu0
    %v2487 = vadd.f32 %v2390, %v2486
    %v2488 = vpop.f32.mrf.mxu0
    %2489 = vmatprep.mubr.bf16.mxu0 %v880
    %2490 = vmatmul.mubr.bf16.gmra.mxu0 %v879
    %v2491 = vpop.f32.mrf.mxu0
    %v2492 = vadd.f32 %v2395, %v2491
    %v2493 = vpop.f32.mrf.mxu0
    %v2494 = vpop.f32.mrf.mxu0
    %v2495 = vadd.f32 %v2398, %v2494
    %v2496 = vpop.f32.mrf.mxu0
    %2497 = vmatprep.mubr.bf16.mxu0 %v896
    %2498 = vmatmul.mubr.bf16.gmra.mxu0 %v895
    %v2499 = vpop.f32.mrf.mxu0
    %v2500 = vadd.f32 %v2403, %v2499
    %v2501 = vpop.f32.mrf.mxu0
    %v2502 = vpop.f32.mrf.mxu0
    %v2503 = vadd.f32 %v2406, %v2502
    %v2504 = vpop.f32.mrf.mxu0
    %2505 = vmatprep.mubr.bf16.mxu0 %v912
    %2506 = vmatmul.mubr.bf16.gmra.mxu0 %v911
    %v2507 = vpop.f32.mrf.mxu0
    %v2508 = vadd.f32 %v2411, %v2507
    %v2509 = vpop.f32.mrf.mxu0
    %v2510 = vpop.f32.mrf.mxu0
    %v2511 = vadd.f32 %v2414, %v2510
    %v2512 = vpop.f32.mrf.mxu0
    %2513 = vmatprep.mubr.bf16.mxu0 %v928
    %2514 = vmatmul.mubr.bf16.gmra.mxu0 %v927
    %v2515 = vpop.f32.mrf.mxu0
    %v2516 = vadd.f32 %v2419, %v2515
    %v2517 = vpop.f32.mrf.mxu0
    %v2518 = vpop.f32.mrf.mxu0
    %v2519 = vadd.f32 %v2422, %v2518
    %v2520 = vpop.f32.mrf.mxu0
    %2521 = vmatprep.mubr.bf16.mxu0 %v944
    %2522 = vmatmul.mubr.bf16.gmra.mxu0 %v943
    %v2523 = vpop.f32.mrf.mxu0
    %v2524 = vadd.f32 %v2427, %v2523
    %v2525 = vpop.f32.mrf.mxu0
    %v2526 = vpop.f32.mrf.mxu0
    %v2527 = vadd.f32 %v2430, %v2526
    %v2528 = vpop.f32.mrf.mxu0
    %2529 = vmatprep.mubr.bf16.mxu0 %v960
    %2530 = vmatmul.mubr.bf16.gmra.mxu0 %v959
    %v2531 = vpop.f32.mrf.mxu0
    %v2532 = vadd.f32 %v2435, %v2531
    %v2533 = vpop.f32.mrf.mxu0
    %v2534 = vpop.f32.mrf.mxu0
    %v2535 = vadd.f32 %v2438, %v2534
    %v2536 = vpop.f32.mrf.mxu0
    %2537 = vdwg.mxu0
    %2538 = vmatprep.subr.bf16.mxu0 0
    %2539 = vmatpush1.bf16.msra.mxu0 %v1722
    %2540 = vmatprep.subr.bf16.mxu0 0
    %2541 = vmatpush1.bf16.msra.mxu0 %v1721
    %2542 = vmatprep.subr.bf16.mxu0 0
    %2543 = vmatpush1.bf16.msra.mxu0 %v1720
    %2544 = vmatprep.subr.bf16.mxu0 0
    %2545 = vmatpush1.bf16.msra.mxu0 %v1719
    %2546 = vmatprep.subr.bf16.mxu0 0
    %2547 = vmatpush1.bf16.msra.mxu0 %v1718
    %2548 = vmatprep.subr.bf16.mxu0 0
    %2549 = vmatpush1.bf16.msra.mxu0 %v1717
    %2550 = vmatprep.subr.bf16.mxu0 0
    %2551 = vmatpush1.bf16.msra.mxu0 %v1716
    %2552 = vmatprep.subr.bf16.mxu0 0
    %2553 = vmatpush1.bf16.msra.mxu0 %v1715
    %2554 = vmatprep.subr.bf16.mxu0 0
    %2555 = vmatpush2.bf16.msra.mxu0 %v1730
    %2556 = vmatprep.subr.bf16.mxu0 0
    %2557 = vmatpush2.bf16.msra.mxu0 %v1729
    %2558 = vmatprep.subr.bf16.mxu0 0
    %2559 = vmatpush2.bf16.msra.mxu0 %v1728
    %2560 = vmatprep.subr.bf16.mxu0 0
    %2561 = vmatpush2.bf16.msra.mxu0 %v1727
    %2562 = vmatprep.subr.bf16.mxu0 0
    %2563 = vmatpush2.bf16.msra.mxu0 %v1726
    %2564 = vmatprep.subr.bf16.mxu0 0
    %2565 = vmatpush2.bf16.msra.mxu0 %v1725
    %2566 = vmatprep.subr.bf16.mxu0 0
    %2567 = vmatpush2.bf16.msra.mxu0 %v1724
    %2568 = vmatprep.subr.bf16.mxu0 0
    %2569 = vmatpush2.bf16.msra.mxu0 %v1723
    %2570 = vmatprep.mubr.bf16.mxu0 %v850
    %2571 = vmatmul.mubr.bf16.gmra.mxu0 %v849
    %v2572 = vpop.f32.mrf.mxu0
    %v2573 = vadd.f32 %v2476, %v2572
    %v2574 = vpop.f32.mrf.mxu0
    %v2575 = vpop.f32.mrf.mxu0
    %v2576 = vadd.f32 %v2479, %v2575
    %v2577 = vpop.f32.mrf.mxu0
    %2578 = vmatprep.mubr.bf16.mxu0 %v866
    %2579 = vmatmul.mubr.bf16.gmra.mxu0 %v865
    %v2580 = vpop.f32.mrf.mxu0
    %v2581 = vadd.f32 %v2484, %v2580
    %v2582 = vpop.f32.mrf.mxu0
    %v2583 = vpop.f32.mrf.mxu0
    %v2584 = vadd.f32 %v2487, %v2583
    %v2585 = vpop.f32.mrf.mxu0
    %2586 = vmatprep.mubr.bf16.mxu0 %v882
    %2587 = vmatmul.mubr.bf16.gmra.mxu0 %v881
    %v2588 = vpop.f32.mrf.mxu0
    %v2589 = vadd.f32 %v2492, %v2588
    %v2590 = vpop.f32.mrf.mxu0
    %v2591 = vpop.f32.mrf.mxu0
    %v2592 = vadd.f32 %v2495, %v2591
    %v2593 = vpop.f32.mrf.mxu0
    %2594 = vmatprep.mubr.bf16.mxu0 %v898
    %2595 = vmatmul.mubr.bf16.gmra.mxu0 %v897
    %v2596 = vpop.f32.mrf.mxu0
    %v2597 = vadd.f32 %v2500, %v2596
    %v2598 = vpop.f32.mrf.mxu0
    %v2599 = vpop.f32.mrf.mxu0
    %v2600 = vadd.f32 %v2503, %v2599
    %v2601 = vpop.f32.mrf.mxu0
    %2602 = vmatprep.mubr.bf16.mxu0 %v914
    %2603 = vmatmul.mubr.bf16.gmra.mxu0 %v913
    %v2604 = vpop.f32.mrf.mxu0
    %v2605 = vadd.f32 %v2508, %v2604
    %v2606 = vpop.f32.mrf.mxu0
    %v2607 = vpop.f32.mrf.mxu0
    %v2608 = vadd.f32 %v2511, %v2607
    %v2609 = vpop.f32.mrf.mxu0
    %2610 = vmatprep.mubr.bf16.mxu0 %v930
    %2611 = vmatmul.mubr.bf16.gmra.mxu0 %v929
    %v2612 = vpop.f32.mrf.mxu0
    %v2613 = vadd.f32 %v2516, %v2612
    %v2614 = vpop.f32.mrf.mxu0
    %v2615 = vpop.f32.mrf.mxu0
    %v2616 = vadd.f32 %v2519, %v2615
    %v2617 = vpop.f32.mrf.mxu0
    %2618 = vmatprep.mubr.bf16.mxu0 %v946
    %2619 = vmatmul.mubr.bf16.gmra.mxu0 %v945
    %v2620 = vpop.f32.mrf.mxu0
    %v2621 = vadd.f32 %v2524, %v2620
    %v2622 = vpop.f32.mrf.mxu0
    %v2623 = vpop.f32.mrf.mxu0
    %v2624 = vadd.f32 %v2527, %v2623
    %v2625 = vpop.f32.mrf.mxu0
    %2626 = vmatprep.mubr.bf16.mxu0 %v962
    %2627 = vmatmul.mubr.bf16.gmra.mxu0 %v961
    %v2628 = vpop.f32.mrf.mxu0
    %v2629 = vadd.f32 %v2532, %v2628
    %v2630 = vpop.f32.mrf.mxu0
    %v2631 = vpop.f32.mrf.mxu0
    %v2632 = vadd.f32 %v2535, %v2631
    %v2633 = vpop.f32.mrf.mxu0
    %2634 = vdwg.mxu0
    %v2635 = vmax.f32 %v2573, 0.0
    %v2636 = vmax.f32 %v2576, 0.0
    %v2637 = vmax.f32 %v2581, 0.0
    %v2638 = vmax.f32 %v2584, 0.0
    %v2639 = vmax.f32 %v2589, 0.0
    %v2640 = vmax.f32 %v2592, 0.0
    %v2641 = vmax.f32 %v2597, 0.0
    %v2642 = vmax.f32 %v2600, 0.0
    %v2643 = vmax.f32 %v2605, 0.0
    %v2644 = vmax.f32 %v2608, 0.0
    %v2645 = vmax.f32 %v2613, 0.0
    %v2646 = vmax.f32 %v2616, 0.0
    %v2647 = vmax.f32 %v2621, 0.0
    %v2648 = vmax.f32 %v2624, 0.0
    %v2649 = vmax.f32 %v2629, 0.0
    %v2650 = vmax.f32 %v2632, 0.0
    %v2651 = vpack.c.bf16 %v2636, %v2635
    %v2652 = vpack.c.bf16 %v2638, %v2637
    %v2653 = vpack.c.bf16 %v2640, %v2639
    %v2654 = vpack.c.bf16 %v2642, %v2641
    %v2655 = vpack.c.bf16 %v2644, %v2643
    %v2656 = vpack.c.bf16 %v2646, %v2645
    %v2657 = vpack.c.bf16 %v2648, %v2647
    %v2658 = vpack.c.bf16 %v2650, %v2649
    %v2659 = vld [vmem:[#allocation7] sm:$0xf]
    %v2660 = vld [vmem:[#allocation7 + $0x4] sm:$0xf]
    %v2663 = vunpack.c.l.b16 %v2659
    %v2664 = vunpack.c.l.b16 %v2660
    %v2665 = vpack.c.b16 %v2664, %v2663
    %vm2666 = vcmask 523264
    %v2668 = vsel %vm2666, %v2665, 0
    %2670 = vmatprep.subr.bf16.mxu0 0
    %2671 = vmatpush1.bf16.msra.mxu0 0
    %2672 = vmatprep.subr.bf16.mxu0 0
    %2673 = vmatpush1.bf16.msra.mxu0 0
    %2674 = vmatprep.subr.bf16.mxu0 0
    %2675 = vmatpush1.bf16.msra.mxu0 0
    %2676 = vmatprep.subr.bf16.mxu0 0
    %2677 = vmatpush1.bf16.msra.mxu0 0
    %2678 = vmatprep.subr.bf16.mxu0 0
    %2679 = vmatpush1.bf16.msra.mxu0 %v2654
    %2680 = vmatprep.subr.bf16.mxu0 0
    %2681 = vmatpush1.bf16.msra.mxu0 %v2653
    %2682 = vmatprep.subr.bf16.mxu0 0
    %2683 = vmatpush1.bf16.msra.mxu0 %v2652
    %2684 = vmatprep.subr.bf16.mxu0 0
    %2685 = vmatpush1.bf16.msra.mxu0 %v2651
    %2686 = vmatprep.subr.bf16.mxu0 0
    %2687 = vmatpush2.bf16.msra.mxu0 0
    %2688 = vmatprep.subr.bf16.mxu0 0
    %2689 = vmatpush2.bf16.msra.mxu0 0
    %2690 = vmatprep.subr.bf16.mxu0 0
    %2691 = vmatpush2.bf16.msra.mxu0 0
    %2692 = vmatprep.subr.bf16.mxu0 0
    %2693 = vmatpush2.bf16.msra.mxu0 0
    %2694 = vmatprep.subr.bf16.mxu0 0
    %2695 = vmatpush2.bf16.msra.mxu0 0
    %2696 = vmatprep.subr.bf16.mxu0 0
    %2697 = vmatpush2.bf16.msra.mxu0 0
    %2698 = vmatprep.subr.bf16.mxu0 0
    %2699 = vmatpush2.bf16.msra.mxu0 0
    %2700 = vmatprep.subr.bf16.mxu0 0
    %2701 = vmatpush2.bf16.msra.mxu0 0
    %2702 = vmatprep.mubr.bf16.mxu0 0
    %2703 = vmatmul.mubr.bf16.gmra.mxu0 %v2668
    %v2704 = vpop.f32.mrf.mxu0
    %v2705 = vadd.f32 0.0, %v2704
    %v2706 = vpop.f32.mrf.mxu0
    %v2707 = vpop.f32.mrf.mxu0
    %v2708 = vadd.f32 0.0, %v2707
    %v2709 = vpop.f32.mrf.mxu0
    %2710 = vdwg.mxu0
    %2711 = vmatprep.subr.bf16.mxu0 0
    %2712 = vmatpush1.bf16.msra.mxu0 0
    %2713 = vmatprep.subr.bf16.mxu0 0
    %2714 = vmatpush1.bf16.msra.mxu0 0
    %2715 = vmatprep.subr.bf16.mxu0 0
    %2716 = vmatpush1.bf16.msra.mxu0 0
    %2717 = vmatprep.subr.bf16.mxu0 0
    %2718 = vmatpush1.bf16.msra.mxu0 0
    %2719 = vmatprep.subr.bf16.mxu0 0
    %2720 = vmatpush1.bf16.msra.mxu0 %v2658
    %2721 = vmatprep.subr.bf16.mxu0 0
    %2722 = vmatpush1.bf16.msra.mxu0 %v2657
    %2723 = vmatprep.subr.bf16.mxu0 0
    %2724 = vmatpush1.bf16.msra.mxu0 %v2656
    %2725 = vmatprep.subr.bf16.mxu0 0
    %2726 = vmatpush1.bf16.msra.mxu0 %v2655
    %2727 = vmatprep.subr.bf16.mxu0 0
    %2728 = vmatpush2.bf16.msra.mxu0 0
    %2729 = vmatprep.subr.bf16.mxu0 0
    %2730 = vmatpush2.bf16.msra.mxu0 0
    %2731 = vmatprep.subr.bf16.mxu0 0
    %2732 = vmatpush2.bf16.msra.mxu0 0
    %2733 = vmatprep.subr.bf16.mxu0 0
    %2734 = vmatpush2.bf16.msra.mxu0 0
    %2735 = vmatprep.subr.bf16.mxu0 0
    %2736 = vmatpush2.bf16.msra.mxu0 0
    %2737 = vmatprep.subr.bf16.mxu0 0
    %2738 = vmatpush2.bf16.msra.mxu0 0
    %2739 = vmatprep.subr.bf16.mxu0 0
    %2740 = vmatpush2.bf16.msra.mxu0 0
    %2741 = vmatprep.subr.bf16.mxu0 0
    %2742 = vmatpush2.bf16.msra.mxu0 0
    %2743 = vmatprep.mubr.bf16.mxu0 0
    %2744 = vmatmul.mubr.bf16.gmra.mxu0 %v2668
    %v2745 = vpop.f32.mrf.mxu0
    %v2746 = vadd.f32 0.0, %v2745
    %v2747 = vpop.f32.mrf.mxu0
    %v2748 = vpop.f32.mrf.mxu0
    %v2749 = vadd.f32 0.0, %v2748
    %v2750 = vpop.f32.mrf.mxu0
    %2751 = vdwg.mxu0
    %2752 = vst [vmem:[#allocation8] sm:$0xff] %v2705
    %2753 = vst [vmem:[#allocation8 + $0x8] sm:$0xff] %v2708
    %2754 = vst [vmem:[#allocation8 + $0x10] sm:$0xff] %v2746
    %2755 = vst [vmem:[#allocation8 + $0x18] sm:$0xff] %v2749
    // Predicated region
    $region30: #{tpu_custom_call.1} parent=1 // pred_check
      _
    $region31: #{tpu_custom_call.1} parent=1 // pred_check_branch
      %2757 = sbr.rel (0) target = $region33
    $region32: #{tpu_custom_call.1} parent=1 // pred_region
      %s2759 = ssub.s32 512, 512
      %2760 = vsyncadd [#allocation4], %s2759
      %s2761 = sshll.u32 [#allocation8], 4
      %s2762 = int_to_ptr.vmem [resolvable:$true] %s2761
      %2767 = dma.vmem_to_hbm [thread:$0]  %s2762, 512, %s4, [#allocation4], 128, 128, 8
    $region33: #{tpu_custom_call.1} parent=1 // pred_fallthru
      _
    // Predicated region
    $region34: #{tpu_custom_call.1} parent=1 // pred_check
      _
    $region35: #{tpu_custom_call.1} parent=1 // pred_check_branch
      %2769 = sbr.rel (0) target = $region37
    $region36: #{tpu_custom_call.1} parent=1 // pred_region
      %2770 = dma.done [#allocation4], 512
    $region37: #{tpu_custom_call.1} parent=1 // pred_fallthru
      _
    %2771 = vsyncpa [#allocation3], 1
    %2772 = vsyncpa [#allocation6], 1
    %2773 = vsyncpa [#allocation4], 1

</llo_original>
